<compile_context>
chip_gen: v5e
topology: v5e:2x2
jax: 0.10.0
libtpu: 0.0.40
codegen_flags: <defaults>
</compile_context>

<pallas_src>
import functools

import jax
import jax.numpy as jnp
from jax import lax
from jax.experimental import pallas as pl
from jax.experimental.pallas import tpu as pltpu


def _round_up(a, b):
    return (a + b - 1) // b * b


def _vmem_limit_bytes():
    """Generation-aware VMEM cap: ~48 MiB on v7x (64 MiB parts), ~96 MiB on v5e/v6e."""
    cap = 64 * 1024 * 1024
    try:
        info = pltpu.get_tpu_info()
        cap = int(getattr(info, "vmem_capacity_bytes", cap) or cap)
    except Exception:
        pass
    return int(min(100 * 1024 * 1024, cap * 3 // 4))


# --------------------------------------------------------------------------- #
# Pass 1: per-edge messages + mean-scatter numerator/count into per-core       #
#         partial accumulators (edge-block grid, reduction axis last).         #
# --------------------------------------------------------------------------- #
def _edge_scatter_kernel(f_in, hidden,                 # static (functools.partial)
                         eattr_ref, esrc_ref, edst_ref, x_ref,
                         w1_ref, b1_ref, w2_ref, b2_ref,
                         agg_ref):
    e_step = pl.program_id(1)
    e_tile = eattr_ref.shape[0]
    n_pad = x_ref.shape[0]
    h_pad = agg_ref.shape[1]

    @pl.when(e_step == 0)
    def _init():
        agg_ref[...] = jnp.zeros_like(agg_ref)

    # ---- x[src] gather as a bf16 one-hot MXU matmul (one-hot is exact) ----
    n_lane = lax.broadcasted_iota(jnp.int32, (1, n_pad), 1)          # [1, N_pad]
    src_oh = (n_lane == esrc_ref[...]).astype(jnp.bfloat16)          # [E_t, N_pad]
    xsrc = jnp.dot(src_oh, x_ref[...],
                   preferred_element_type=jnp.float32)               # [E_t, F_pad] f32

    # ---- edge MLP layer 1 (K=1): VPU broadcast multiply, no MXU pass ----
    h1 = jnp.maximum(eattr_ref[...] * w1_ref[...] + b1_ref[...], 0.0)
    h1 = h1.astype(jnp.bfloat16)                                     # [E_t, M_pad]

    # ---- edge MLP layer 2 + message contraction, slab by slab ----
    # Only one [E_t, H_pad] slab of MXU result is live at a time (no full
    # [E_t, F*H_pad] wflat -> no vreg-file blow-out / spills).
    m = jnp.zeros((e_tile, h_pad), jnp.float32)
    for f in range(f_in):                                            # tiny static unroll
        slab = jnp.dot(h1, w2_ref[:, f * h_pad:(f + 1) * h_pad],
                       preferred_element_type=jnp.float32)
        slab = slab + b2_ref[:, f * h_pad:(f + 1) * h_pad]
        m = m + xsrc[:, f:f + 1] * slab

    # Fold an exact ones-lane (lane `hidden`) into m: the scatter matmul below
    # then produces the per-node in-degree count in the same MXU pass.
    lane = lax.broadcasted_iota(jnp.int32, (1, h_pad), 1)
    m = jnp.where(lane == hidden, 1.0, m)

    # ---- scatter-add to destination nodes: pre-transposed one-hot (lane-dense K) ----
    node_ids = lax.broadcasted_iota(jnp.int32, (n_pad, 1), 0)
    dst_oh_t = (node_ids == edst_ref[...]).astype(jnp.bfloat16)      # [N_pad, E_t]
    agg_ref[...] += jnp.dot(dst_oh_t, m.astype(jnp.bfloat16),
                            preferred_element_type=jnp.float32)


# --------------------------------------------------------------------------- #
# Pass 2: combine partials, mean-aggregate, root+bias+relu, global mean pool,  #
#         final linear.                                                         #
# --------------------------------------------------------------------------- #
def _finalize_kernel(hidden, n_parts,                   # static (functools.partial)
                     agg_ref, x_ref, batch_ref,
                     root_ref, bias_ref, linw_ref, linb_ref,
                     out_ref):
    h_pad = root_ref.shape[1]
    g_pad = out_ref.shape[0]

    # Combine per-core partial scatter sums (n_parts is tiny, static unroll).
    acc = agg_ref[0]
    for s in range(1, n_parts):
        acc = acc + agg_ref[s]

    cnt = acc[:, hidden:hidden + 1]                     # in-degree (exact, f32)
    agg = acc / jnp.maximum(cnt, 1.0)                   # mean aggregation (exact div)

    h = agg + jnp.dot(x_ref[...], root_ref[...],
                      preferred_element_type=jnp.float32) + bias_ref[...]
    h = jnp.maximum(h, 0.0)
    # Exact ones-lane so the pooling matmul also yields per-graph node counts.
    lane = lax.broadcasted_iota(jnp.int32, (1, h_pad), 1)
    h = jnp.where(lane == hidden, 1.0, h)

    # ---- global mean pool: pre-transposed one-hot [G_pad, N_pad] ----
    g_ids = lax.broadcasted_iota(jnp.int32, (g_pad, 1), 0)
    b_oh_t = (g_ids == batch_ref[...]).astype(jnp.bfloat16)
    pool = jnp.dot(b_oh_t, h.astype(jnp.bfloat16),
                   preferred_element_type=jnp.float32)               # [G_pad, H_pad]
    pooled = pool / jnp.maximum(pool[:, hidden:hidden + 1], 1.0)

    # dropout(0.3) is identity at inference; padded rows/cols of lin_w are zero,
    # so the count lane and padding never leak into the logits.
    out_ref[...] = (jnp.dot(pooled.astype(jnp.bfloat16), linw_ref[...],
                            preferred_element_type=jnp.float32) + linb_ref[...])


def edge_attr_gnn_light(x, edge_index, edge_attr, batch, params, num_graphs,
                        *, edge_tile=256, core_splits=2):
    """JAX/Pallas forward of EdgeAttrGNNLight (inference).

    edge_tile:   edges per grid step (multiple of 128).  256 is a good default on
                 v7x; 512 can pay off on v6e/v5e for big edge counts if VMEM allows.
    core_splits: number of partial scatter accumulators; the leading grid axis is
                 'parallel' so edge blocks shard across v7x's 2 TensorCores.
    """
    N, F = x.shape
    E = edge_attr.shape[0]
    H = params["root"].shape[1]
    C = params["lin_w"].shape[1]
    E_MLP = params["w1"].shape[1]                       # 64 (nn1 hidden)

    LANE, SUB = 128, 8
    F_pad = _round_up(F, LANE)
    H_pad = _round_up(H + 1, LANE)                      # +1: spare lane for counts
    C_pad = _round_up(C, LANE)
    M_pad = _round_up(E_MLP, LANE)
    N_pad = _round_up(N, SUB)
    G_pad = _round_up(num_graphs, SUB)

    # Count-lane trick relies on padded columns >= H of w2/b2/bias/root/lin_w
    # being exactly zero and on lane index H existing inside the padded width.
    assert H < H_pad, "count lane must live inside the padded hidden width"

    S = max(1, min(core_splits, int(pl.cdiv(E, edge_tile))))
    E_pad = _round_up(E, edge_tile * S)
    bpc = E_pad // (edge_tile * S)                      # edge blocks per partial

    f32, bf16, i32 = jnp.float32, jnp.bfloat16, jnp.int32

    # --- pad data (sentinels: esrc/edst/batch -> -1 => all-zero one-hots) ---
    x_p = jnp.zeros((N_pad, F_pad), f32).at[:N, :F].set(x.astype(f32)).astype(bf16)
    ea_p = jnp.zeros((E_pad, 1), f32).at[:E].set(edge_attr.astype(f32).reshape(E, 1))
    esrc_p = jnp.full((E_pad, 1), -1, i32).at[:E, 0].set(edge_index[0].astype(i32))
    edst_p = jnp.full((1, E_pad), -1, i32).at[0, :E].set(edge_index[1].astype(i32))
    batch_p = jnp.full((1, N_pad), -1, i32).at[0, :N].set(batch.astype(i32))

    # --- pad params; w2/b2 laid out so each f-slab is a full 128-lane tile ---
    w1_p = jnp.zeros((1, M_pad), f32).at[:, :E_MLP].set(params["w1"])
    b1_p = jnp.zeros((1, M_pad), f32).at[:, :E_MLP].set(params["b1"])
    w2_p = (jnp.zeros((M_pad, F, H_pad), f32)
            .at[:E_MLP, :, :H].set(params["w2"].reshape(E_MLP, F, H))
            .reshape(M_pad, F * H_pad).astype(bf16))
    b2_p = (jnp.zeros((1, F, H_pad), f32)
            .at[:, :, :H].set(params["b2"].reshape(1, F, H))
            .reshape(1, F * H_pad))
    root_p = jnp.zeros((F_pad, H_pad), f32).at[:F, :H].set(params["root"]).astype(bf16)
    bias_p = jnp.zeros((1, H_pad), f32).at[:, :H].set(params["bias"])
    linw_p = jnp.zeros((H_pad, C_pad), f32).at[:H, :C].set(params["lin_w"]).astype(bf16)
    linb_p = jnp.zeros((1, C_pad), f32).at[:, :C].set(params["lin_b"])

    vmem_limit = _vmem_limit_bytes()
    res2 = lambda c, e: (0, 0)

    # ---------------- pass 1: edge grid, per-core partial scatter ----------------
    scatter_flops = int(E_pad * (2 * N_pad * F_pad + 2 * M_pad
                                 + 2 * M_pad * F * H_pad + 2 * F * H_pad
                                 + 2 * N_pad * H_pad))
    scatter_bytes = int(ea_p.size * 4 + esrc_p.size * 4 + edst_p.size * 4
                        + x_p.size * 2 + w2_p.size * 2
                        + (w1_p.size + b1_p.size + b2_p.size) * 4
                        + S * N_pad * H_pad * 4)

    agg_parts = pl.pallas_call(
        functools.partial(_edge_scatter_kernel, F, H),
        out_shape=jax.ShapeDtypeStruct((S, N_pad, H_pad), f32),
        grid=(S, bpc),
        in_specs=[
            pl.BlockSpec((edge_tile, 1), lambda c, e: (c * bpc + e, 0)),   # edge_attr
            pl.BlockSpec((edge_tile, 1), lambda c, e: (c * bpc + e, 0)),   # edge src
            pl.BlockSpec((1, edge_tile), lambda c, e: (0, c * bpc + e)),   # edge dst
            pl.BlockSpec((N_pad, F_pad), res2),                            # x (bf16)
            pl.BlockSpec((1, M_pad), res2),                                # w1
            pl.BlockSpec((1, M_pad), res2),                                # b1
            pl.BlockSpec((M_pad, F * H_pad), res2),                        # w2 (bf16 slabs)
            pl.BlockSpec((1, F * H_pad), res2),                            # b2 (slabs)
        ],
        out_specs=pl.BlockSpec((None, N_pad, H_pad), lambda c, e: (c, 0, 0)),
        compiler_params=pltpu.CompilerParams(
            dimension_semantics=("parallel", "arbitrary"),
            vmem_limit_bytes=vmem_limit),
        cost_estimate=pl.CostEstimate(flops=scatter_flops, transcendentals=0,
                                      bytes_accessed=scatter_bytes),
    )(ea_p, esrc_p, edst_p, x_p, w1_p, b1_p, w2_p, b2_p)

    # ---------------- pass 2: mean aggr + root + relu + pool + lin1 ----------------
    fin_flops = int(2 * N_pad * F_pad * H_pad + 2 * G_pad * N_pad * H_pad
                    + 2 * G_pad * H_pad * C_pad)
    fin_bytes = int(S * N_pad * H_pad * 4 + x_p.size * 2 + batch_p.size * 4
                    + root_p.size * 2 + bias_p.size * 4
                    + linw_p.size * 2 + linb_p.size * 4 + G_pad * C_pad * 4)
    res1 = lambda i: (0, 0)

    out_p = pl.pallas_call(
        functools.partial(_finalize_kernel, H, S),
        out_shape=jax.ShapeDtypeStruct((G_pad, C_pad), f32),
        grid=(1,),
        in_specs=[
            pl.BlockSpec((S, N_pad, H_pad), lambda i: (0, 0, 0)),          # partial aggs
            pl.BlockSpec((N_pad, F_pad), res1),                            # x (bf16)
            pl.BlockSpec((1, N_pad), res1),                                # batch (lanes)
            pl.BlockSpec((F_pad, H_pad), res1),                            # root (bf16)
            pl.BlockSpec((1, H_pad), res1),                                # conv bias
            pl.BlockSpec((H_pad, C_pad), res1),                            # lin1 W (bf16)
            pl.BlockSpec((1, C_pad), res1),                                # lin1 b
        ],
        out_specs=pl.BlockSpec((G_pad, C_pad), res1),
        compiler_params=pltpu.CompilerParams(
            dimension_semantics=("arbitrary",),
            vmem_limit_bytes=vmem_limit),
        cost_estimate=pl.CostEstimate(flops=fin_flops, transcendentals=0,
                                      bytes_accessed=fin_bytes),
    )(agg_parts, x_p, batch_p, root_p, bias_p, linw_p, linb_p)

    return out_p[:num_graphs, :C]


def _reference_forward(x, edge_index, edge_attr, batch, params, num_graphs):
    """Pure-JAX f32 reference of the same math (for validation)."""
    N, F = x.shape
    E = edge_attr.shape[0]
    H = params["root"].shape[1]
    esrc, edst = edge_index[0], edge_index[1]

    h1 = jnp.maximum(edge_attr @ params["w1"] + params["b1"], 0.0)
    wflat = h1 @ params["w2"] + params["b2"]
    W = wflat.reshape(E, F, H)
    x_src = x[esrc]
    m = jnp.einsum("ef,efh->eh", x_src, W)

    agg_sum = jnp.zeros((N, H)).at[edst].add(m)
    cnt = jnp.zeros((N,)).at[edst].add(1.0)
    agg = agg_sum / jnp.maximum(cnt, 1.0)[:, None]

    h = jnp.maximum(agg + x @ params["root"] + params["bias"], 0.0)

    pool_sum = jnp.zeros((num_graphs, H)).at[batch].add(h)
    pool_cnt = jnp.zeros((num_graphs,)).at[batch].add(1.0)
    pooled = pool_sum / jnp.maximum(pool_cnt, 1.0)[:, None]

    return pooled @ params["lin_w"] + params["lin_b"]


def init_params(key, input_feature, hidden_channels, num_classes):
    ks = jax.random.split(key, 8)
    F, H, C = input_feature, hidden_channels, num_classes
    return {
        # nn1: Linear(1, 64) -> ReLU -> Linear(64, F*H)
        "w1": 0.2 * jax.random.normal(ks[0], (1, 64), jnp.float32),
        "b1": 0.05 * jax.random.normal(ks[1], (1, 64), jnp.float32),
        "w2": 0.1 * jax.random.normal(ks[2], (64, F * H), jnp.float32),
        "b2": 0.05 * jax.random.normal(ks[3], (1, F * H), jnp.float32),
        # NNConv root weight [F, H] + bias [H]
        "root": 0.2 * jax.random.normal(ks[4], (F, H), jnp.float32),
        "bias": 0.05 * jax.random.normal(ks[5], (1, H), jnp.float32),
        # lin1: Linear(H, C)
        "lin_w": 0.2 * jax.random.normal(ks[6], (H, C), jnp.float32),
        "lin_b": 0.05 * jax.random.normal(ks[7], (1, C), jnp.float32),
    }


if __name__ == "__main__":
    key = jax.random.PRNGKey(0)
    k_x, k_ea, k_src, k_dst, k_p = jax.random.split(key, 5)

    # Small graph: N=12 nodes, E=300 edges (2 edge blocks -> exercises both the
    # per-core partial split and the cross-block accumulation), F_in=4, H=32,
    # 2 graphs, 3 classes.
    N, E, F_IN, HID, G, C = 12, 300, 4, 32, 2, 3

    x = jax.random.normal(k_x, (N, F_IN), jnp.float32)
    edge_attr = jax.random.normal(k_ea, (E, 1), jnp.float32)
    edge_src = jax.random.randint(k_src, (E,), 0, N, jnp.int32)
    edge_dst = jax.random.randint(k_dst, (E,), 0, N, jnp.int32)
    edge_index = jnp.stack([edge_src, edge_dst], axis=0)            # [2, E]
    batch = jnp.concatenate([jnp.zeros((N // 2,), jnp.int32),
                             jnp.ones((N - N // 2,), jnp.int32)])

    params = init_params(k_p, F_IN, HID, C)

    out = edge_attr_gnn_light(x, edge_index, edge_attr, batch, params, G)
    out = jax.block_until_ready(out)

    ref = _reference_forward(x, edge_index, edge_attr, batch, params, G)
    assert out.shape == (G, C)
    # bf16 MXU operands => loose tolerance vs the f32 reference.
    assert jnp.allclose(out, ref, atol=5e-2, rtol=5e-2), (out, ref)

    print("KERNEL_OK")
</pallas_src>

<mosaic_0001>
module attributes {stable_mosaic.version = 11 : i64} {
  func.func @_edge_scatter_kernel(%arg0: i32, %arg1: i32, %arg2: memref<256x1xf32, #tpu.memory_space<vmem>>, %arg3: memref<256x1xi32, #tpu.memory_space<vmem>>, %arg4: memref<1x256xi32, #tpu.memory_space<vmem>>, %arg5: memref<16x128xbf16, #tpu.memory_space<vmem>>, %arg6: memref<1x128xf32, #tpu.memory_space<vmem>>, %arg7: memref<1x128xf32, #tpu.memory_space<vmem>>, %arg8: memref<128x512xbf16, #tpu.memory_space<vmem>>, %arg9: memref<1x512xf32, #tpu.memory_space<vmem>>, %arg10: memref<1x16x128xf32, #tpu.memory_space<vmem>>) attributes {dimension_semantics = [#tpu.dimension_semantics<parallel>, #tpu.dimension_semantics<arbitrary>], iteration_bounds = array<i64: 2, 1>, scalar_prefetch = 0 : i64, scratch_operands = 0 : i64, tpu.core_type = #tpu.core_type<tc>, window_params = [{transform_indices = @transform_0, window_bounds = array<i64: 256, 1>}, {transform_indices = @transform_1, window_bounds = array<i64: 256, 1>}, {transform_indices = @transform_2, window_bounds = array<i64: 1, 256>}, {pipeline_mode = #tpu.pipeline_mode<synchronous>, transform_indices = @transform_3, window_bounds = array<i64: 16, 128>}, {pipeline_mode = #tpu.pipeline_mode<synchronous>, transform_indices = @transform_4, window_bounds = array<i64: 1, 128>}, {pipeline_mode = #tpu.pipeline_mode<synchronous>, transform_indices = @transform_5, window_bounds = array<i64: 1, 128>}, {pipeline_mode = #tpu.pipeline_mode<synchronous>, transform_indices = @transform_6, window_bounds = array<i64: 128, 512>}, {pipeline_mode = #tpu.pipeline_mode<synchronous>, transform_indices = @transform_7, window_bounds = array<i64: 1, 512>}, {transform_indices = @transform_8, window_bounds = array<i64: 1, 16, 128>}]} {
    %c0_i32 = arith.constant 0 : i32
    %0 = arith.cmpi eq, %arg1, %c0_i32 : i32
    %1 = arith.extui %0 : i1 to i32
    %c0_i32_0 = arith.constant 0 : i32
    %2 = arith.cmpi ne, %1, %c0_i32_0 : i32
    scf.if %2 {
      %cst_39 = arith.constant 0.000000e+00 : f32
      %84 = vector.broadcast %cst_39 : f32 to vector<16x128xf32>
      %c0_40 = arith.constant 0 : index
      %c0_41 = arith.constant 0 : index
      %c0_42 = arith.constant 0 : index
      %85 = vector.load %arg10[%c0_40, %c0_41, %c0_42] : memref<1x16x128xf32, #tpu.memory_space<vmem>>, vector<1x16x128xf32>
      %86 = vector.shape_cast %85 : vector<1x16x128xf32> to vector<16x128xf32>
      %87 = vector.shape_cast %84 : vector<16x128xf32> to vector<1x16x128xf32>
      tpu.vector_store %arg10[%c0_40, %c0_41, %c0_42], %87 {strides = array<i32>} : memref<1x16x128xf32, #tpu.memory_space<vmem>>, vector<1x16x128xf32>,
    } else {
    }
    %3 = tpu.iota {dimensions = array<i32: 1>} : vector<1x16xi32>
    %c0 = arith.constant 0 : index
    %c0_1 = arith.constant 0 : index
    %4 = vector.load %arg3[%c0, %c0_1] : memref<256x1xi32, #tpu.memory_space<vmem>>, vector<256x1xi32>
    %5 = vector.broadcast %3 : vector<1x16xi32> to vector<256x16xi32>
    %6 = vector.broadcast %4 : vector<256x1xi32> to vector<256x16xi32>
    %7 = arith.cmpi eq, %5, %6 : vector<256x16xi32>
    %8 = arith.extui %7 : vector<256x16xi1> to vector<256x16xi32>
    %9 = arith.sitofp %8 : vector<256x16xi32> to vector<256x16xf32>
    %10 = arith.truncf %9 : vector<256x16xf32> to vector<256x16xbf16>
    %c0_2 = arith.constant 0 : index
    %c0_3 = arith.constant 0 : index
    %11 = vector.load %arg5[%c0_2, %c0_3] : memref<16x128xbf16, #tpu.memory_space<vmem>>, vector<16x128xbf16>
    %cst = arith.constant dense<0.000000e+00> : vector<256x128xf32>
    %12 = tpu.matmul %10, %11, %cst {dimension_numbers = #tpu.dot_dimension_numbers<[1], [0], [0], [1], [0, 0, 1, 1], [], []>} : vector<256x16xbf16>, vector<16x128xbf16>, vector<256x128xf32> -> vector<256x128xf32>
    %c0_4 = arith.constant 0 : index
    %c0_5 = arith.constant 0 : index
    %13 = vector.load %arg2[%c0_4, %c0_5] : memref<256x1xf32, #tpu.memory_space<vmem>>, vector<256x1xf32>
    %c0_6 = arith.constant 0 : index
    %c0_7 = arith.constant 0 : index
    %14 = vector.load %arg6[%c0_6, %c0_7] : memref<1x128xf32, #tpu.memory_space<vmem>>, vector<1x128xf32>
    %15 = vector.broadcast %13 : vector<256x1xf32> to vector<256x128xf32>
    %16 = vector.broadcast %14 : vector<1x128xf32> to vector<256x128xf32>
    %17 = arith.mulf %15, %16 : vector<256x128xf32>
    %c0_8 = arith.constant 0 : index
    %c0_9 = arith.constant 0 : index
    %18 = vector.load %arg7[%c0_8, %c0_9] : memref<1x128xf32, #tpu.memory_space<vmem>>, vector<1x128xf32>
    %19 = vector.broadcast %18 : vector<1x128xf32> to vector<256x128xf32>
    %20 = arith.addf %17, %19 : vector<256x128xf32>
    %cst_10 = arith.constant 0.000000e+00 : f32
    %21 = vector.broadcast %cst_10 : f32 to vector<256x128xf32>
    %22 = arith.maximumf %20, %21 : vector<256x128xf32>
    %23 = arith.truncf %22 : vector<256x128xf32> to vector<256x128xbf16>
    %cst_11 = arith.constant 0.000000e+00 : f32
    %24 = vector.broadcast %cst_11 : f32 to vector<256x128xf32>
    %c0_12 = arith.constant 0 : index
    %c0_13 = arith.constant 0 : index
    %25 = vector.load %arg8[%c0_12, %c0_13] : memref<128x512xbf16, #tpu.memory_space<vmem>>, vector<128x128xbf16>
    %cst_14 = arith.constant dense<0.000000e+00> : vector<256x128xf32>
    %26 = tpu.matmul %23, %25, %cst_14 {dimension_numbers = #tpu.dot_dimension_numbers<[1], [0], [0], [1], [0, 0, 1, 1], [], []>} : vector<256x128xbf16>, vector<128x128xbf16>, vector<256x128xf32> -> vector<256x128xf32>
    %c0_15 = arith.constant 0 : index
    %c0_16 = arith.constant 0 : index
    %27 = vector.load %arg9[%c0_15, %c0_16] : memref<1x512xf32, #tpu.memory_space<vmem>>, vector<1x128xf32>
    %28 = vector.broadcast %27 : vector<1x128xf32> to vector<256x128xf32>
    %29 = arith.addf %26, %28 : vector<256x128xf32>
    %30 = vector.extract_strided_slice %12 {offsets = [0, 0], sizes = [256, 1], strides = [1, 1]} : vector<256x128xf32> to vector<256x1xf32>
    %31 = vector.broadcast %30 : vector<256x1xf32> to vector<256x128xf32>
    %32 = arith.mulf %31, %29 : vector<256x128xf32>
    %33 = arith.addf %24, %32 : vector<256x128xf32>
    %c0_17 = arith.constant 0 : index
    %c128 = arith.constant 128 : index
    %34 = vector.load %arg8[%c0_17, %c128] : memref<128x512xbf16, #tpu.memory_space<vmem>>, vector<128x128xbf16>
    %cst_18 = arith.constant dense<0.000000e+00> : vector<256x128xf32>
    %35 = tpu.matmul %23, %34, %cst_18 {dimension_numbers = #tpu.dot_dimension_numbers<[1], [0], [0], [1], [0, 0, 1, 1], [], []>} : vector<256x128xbf16>, vector<128x128xbf16>, vector<256x128xf32> -> vector<256x128xf32>
    %c0_19 = arith.constant 0 : index
    %c128_20 = arith.constant 128 : index
    %36 = vector.load %arg9[%c0_19, %c128_20] : memref<1x512xf32, #tpu.memory_space<vmem>>, vector<1x128xf32>
    %37 = vector.broadcast %36 : vector<1x128xf32> to vector<256x128xf32>
    %38 = arith.addf %35, %37 : vector<256x128xf32>
    %39 = vector.extract_strided_slice %12 {offsets = [0, 1], sizes = [256, 1], strides = [1, 1]} : vector<256x128xf32> to vector<256x1xf32>
    %40 = vector.broadcast %39 : vector<256x1xf32> to vector<256x128xf32>
    %41 = arith.mulf %40, %38 : vector<256x128xf32>
    %42 = arith.addf %33, %41 : vector<256x128xf32>
    %c0_21 = arith.constant 0 : index
    %c256 = arith.constant 256 : index
    %43 = vector.load %arg8[%c0_21, %c256] : memref<128x512xbf16, #tpu.memory_space<vmem>>, vector<128x128xbf16>
    %cst_22 = arith.constant dense<0.000000e+00> : vector<256x128xf32>
    %44 = tpu.matmul %23, %43, %cst_22 {dimension_numbers = #tpu.dot_dimension_numbers<[1], [0], [0], [1], [0, 0, 1, 1], [], []>} : vector<256x128xbf16>, vector<128x128xbf16>, vector<256x128xf32> -> vector<256x128xf32>
    %c0_23 = arith.constant 0 : index
    %c256_24 = arith.constant 256 : index
    %45 = vector.load %arg9[%c0_23, %c256_24] : memref<1x512xf32, #tpu.memory_space<vmem>>, vector<1x128xf32>
    %46 = vector.broadcast %45 : vector<1x128xf32> to vector<256x128xf32>
    %47 = arith.addf %44, %46 : vector<256x128xf32>
    %48 = vector.extract_strided_slice %12 {offsets = [0, 2], sizes = [256, 1], strides = [1, 1]} : vector<256x128xf32> to vector<256x1xf32>
    %49 = vector.broadcast %48 : vector<256x1xf32> to vector<256x128xf32>
    %50 = arith.mulf %49, %47 : vector<256x128xf32>
    %51 = arith.addf %42, %50 : vector<256x128xf32>
    %c0_25 = arith.constant 0 : index
    %c384 = arith.constant 384 : index
    %52 = vector.load %arg8[%c0_25, %c384] : memref<128x512xbf16, #tpu.memory_space<vmem>>, vector<128x128xbf16>
    %cst_26 = arith.constant dense<0.000000e+00> : vector<256x128xf32>
    %53 = tpu.matmul %23, %52, %cst_26 {dimension_numbers = #tpu.dot_dimension_numbers<[1], [0], [0], [1], [0, 0, 1, 1], [], []>} : vector<256x128xbf16>, vector<128x128xbf16>, vector<256x128xf32> -> vector<256x128xf32>
    %c0_27 = arith.constant 0 : index
    %c384_28 = arith.constant 384 : index
    %54 = vector.load %arg9[%c0_27, %c384_28] : memref<1x512xf32, #tpu.memory_space<vmem>>, vector<1x128xf32>
    %55 = vector.broadcast %54 : vector<1x128xf32> to vector<256x128xf32>
    %56 = arith.addf %53, %55 : vector<256x128xf32>
    %57 = vector.extract_strided_slice %12 {offsets = [0, 3], sizes = [256, 1], strides = [1, 1]} : vector<256x128xf32> to vector<256x1xf32>
    %58 = vector.broadcast %57 : vector<256x1xf32> to vector<256x128xf32>
    %59 = arith.mulf %58, %56 : vector<256x128xf32>
    %60 = arith.addf %51, %59 : vector<256x128xf32>
    %61 = tpu.iota {dimensions = array<i32: 1>} : vector<1x128xi32>
    %c32_i32 = arith.constant 32 : i32
    %62 = vector.broadcast %c32_i32 : i32 to vector<1x128xi32>
    %63 = arith.cmpi eq, %61, %62 : vector<1x128xi32>
    %cst_29 = arith.constant 1.000000e+00 : f32
    %64 = vector.shape_cast %63 : vector<1x128xi1> to vector<1x128xi1>
    %65 = vector.broadcast %64 : vector<1x128xi1> to vector<256x128xi1>
    %66 = vector.broadcast %cst_29 : f32 to vector<256x128xf32>
    %67 = arith.select %65, %66, %60 : vector<256x128xi1>, vector<256x128xf32>
    %68 = tpu.iota {dimensions = array<i32: 0>} : vector<16x1xi32>
    %c0_30 = arith.constant 0 : index
    %c0_31 = arith.constant 0 : index
    %69 = vector.load %arg4[%c0_30, %c0_31] : memref<1x256xi32, #tpu.memory_space<vmem>>, vector<1x256xi32>
    %70 = vector.broadcast %68 : vector<16x1xi32> to vector<16x256xi32>
    %71 = vector.broadcast %69 : vector<1x256xi32> to vector<16x256xi32>
    %72 = arith.cmpi eq, %70, %71 : vector<16x256xi32>
    %73 = arith.extui %72 : vector<16x256xi1> to vector<16x256xi32>
    %74 = arith.sitofp %73 : vector<16x256xi32> to vector<16x256xf32>
    %75 = arith.truncf %74 : vector<16x256xf32> to vector<16x256xbf16>
    %c0_32 = arith.constant 0 : index
    %c0_33 = arith.constant 0 : index
    %c0_34 = arith.constant 0 : index
    %76 = vector.load %arg10[%c0_32, %c0_33, %c0_34] : memref<1x16x128xf32, #tpu.memory_space<vmem>>, vector<1x16x128xf32>
    %77 = vector.shape_cast %76 : vector<1x16x128xf32> to vector<16x128xf32>
    %78 = arith.truncf %67 : vector<256x128xf32> to vector<256x128xbf16>
    %cst_35 = arith.constant dense<0.000000e+00> : vector<16x128xf32>
    %79 = tpu.matmul %75, %78, %cst_35 {dimension_numbers = #tpu.dot_dimension_numbers<[1], [0], [0], [1], [0, 0, 1, 1], [], []>} : vector<16x256xbf16>, vector<256x128xbf16>, vector<16x128xf32> -> vector<16x128xf32>
    %80 = arith.addf %77, %79 : vector<16x128xf32>
    %c0_36 = arith.constant 0 : index
    %c0_37 = arith.constant 0 : index
    %c0_38 = arith.constant 0 : index
    %81 = vector.load %arg10[%c0_36, %c0_37, %c0_38] : memref<1x16x128xf32, #tpu.memory_space<vmem>>, vector<1x16x128xf32>
    %82 = vector.shape_cast %81 : vector<1x16x128xf32> to vector<16x128xf32>
    %83 = vector.shape_cast %80 : vector<16x128xf32> to vector<1x16x128xf32>
    tpu.vector_store %arg10[%c0_36, %c0_37, %c0_38], %83 {strides = array<i32>} : memref<1x16x128xf32, #tpu.memory_space<vmem>>, vector<1x16x128xf32>,
    return
  }
  func.func @transform_0(%arg0: i32, %arg1: i32) -> (i32, i32) {
    %c1_i32 = arith.constant 1 : i32
    %0 = arith.muli %arg0, %c1_i32 : i32
    %1 = arith.addi %0, %arg1 : i32
    %c0_i32 = arith.constant 0 : i32
    %c0_i32_0 = arith.constant 0 : i32
    return %1, %c0_i32 : i32, i32
  }
  func.func @transform_1(%arg0: i32, %arg1: i32) -> (i32, i32) {
    %c1_i32 = arith.constant 1 : i32
    %0 = arith.muli %arg0, %c1_i32 : i32
    %1 = arith.addi %0, %arg1 : i32
    %c0_i32 = arith.constant 0 : i32
    %c0_i32_0 = arith.constant 0 : i32
    return %1, %c0_i32 : i32, i32
  }
  func.func @transform_2(%arg0: i32, %arg1: i32) -> (i32, i32) {
    %c1_i32 = arith.constant 1 : i32
    %0 = arith.muli %arg0, %c1_i32 : i32
    %1 = arith.addi %0, %arg1 : i32
    %c0_i32 = arith.constant 0 : i32
    %c0_i32_0 = arith.constant 0 : i32
    return %c0_i32, %1 : i32, i32
  }
  func.func @transform_3(%arg0: i32, %arg1: i32) -> (i32, i32) {
    %c0_i32 = arith.constant 0 : i32
    %c0_i32_0 = arith.constant 0 : i32
    %c0_i32_1 = arith.constant 0 : i32
    return %c0_i32, %c0_i32_0 : i32, i32
  }
  func.func @transform_4(%arg0: i32, %arg1: i32) -> (i32, i32) {
    %c0_i32 = arith.constant 0 : i32
    %c0_i32_0 = arith.constant 0 : i32
    %c0_i32_1 = arith.constant 0 : i32
    return %c0_i32, %c0_i32_0 : i32, i32
  }
  func.func @transform_5(%arg0: i32, %arg1: i32) -> (i32, i32) {
    %c0_i32 = arith.constant 0 : i32
    %c0_i32_0 = arith.constant 0 : i32
    %c0_i32_1 = arith.constant 0 : i32
    return %c0_i32, %c0_i32_0 : i32, i32
  }
  func.func @transform_6(%arg0: i32, %arg1: i32) -> (i32, i32) {
    %c0_i32 = arith.constant 0 : i32
    %c0_i32_0 = arith.constant 0 : i32
    %c0_i32_1 = arith.constant 0 : i32
    return %c0_i32, %c0_i32_0 : i32, i32
  }
  func.func @transform_7(%arg0: i32, %arg1: i32) -> (i32, i32) {
    %c0_i32 = arith.constant 0 : i32
    %c0_i32_0 = arith.constant 0 : i32
    %c0_i32_1 = arith.constant 0 : i32
    return %c0_i32, %c0_i32_0 : i32, i32
  }
  func.func @transform_8(%arg0: i32, %arg1: i32) -> (i32, i32, i32) {
    %c0_i32 = arith.constant 0 : i32
    %c0_i32_0 = arith.constant 0 : i32
    %c0_i32_1 = arith.constant 0 : i32
    return %arg0, %c0_i32, %c0_i32_0 : i32, i32, i32
  }
}

</mosaic_0001>

<llo_original>
// kernel: tpu_custom_call.1
$region0: #{tpu_custom_call.1}
  #allocation0 [shape = 'u32[]', space=smem, size = 0x4, offset = 0x4, fixed_abs, tag = 'smem constant byte address 0x4 - core index']
  #allocation1 [shape = 'u32[72,128]{1,0:T(1,128)}', space=vmem, size = 0x9000, scoped, tag = 'internal scratch']
  %s0 = inlined_call_operand.vmem [shape: f32[512,1], index: 0, kind: input, shape index: {}]
  %s1 = inlined_call_operand.vmem [shape: s32[512,1], index: 1, kind: input, shape index: {}]
  %s2 = inlined_call_operand.vmem [shape: s32[1,512], index: 2, kind: input, shape index: {}]
  %s3 = inlined_call_operand.vmem [shape: bf16[16,128], index: 3, kind: input, shape index: {}]
  %s4 = inlined_call_operand.vmem [shape: f32[1,128], index: 4, kind: input, shape index: {}]
  %s5 = inlined_call_operand.vmem [shape: f32[1,128], index: 5, kind: input, shape index: {}]
  %s6 = inlined_call_operand.vmem [shape: bf16[128,512], index: 6, kind: input, shape index: {}]
  %s7 = inlined_call_operand.vmem [shape: f32[1,512], index: 7, kind: input, shape index: {}]
  %s8 = inlined_call_operand.hbm [shape: f32[2,16,128], index: 8, kind: output, shape index: {}]
  %s9 = sld [smem:[#allocation0]]
  $region69: #{tpu_custom_call.1} parent=0
    _
  %s11 = ssub.s32 1, %s9
  %s12 = scalar_select 0, %s11, %s9
  $region1: #{tpu_custom_call.1} parent=0
    #allocation2 [shape = 'u8[16384]{0}', space=vmem, size = 0x4000, scoped, tag = 'output window, operand 0']
    #allocation3 [shape = 's32[2]{0}', space=sflag, size = 0x8, scoped, tag = 'scoped memory for tpu_custom_call.1']
    %13 = vsyncpa [#allocation3], 0
    %s14 = scalar_lea.sflag [#allocation3], 1
    %15 = vsyncpa %s14, 0
    loop: start=0, step=1, limit=4
    $region2: #{tpu_custom_call.1} parent=1 // loop_pre_header
      _
    $region3: #{tpu_custom_call.1} parent=1 // loop_header
      %s17 = sphi 0, %s21
      %p18 = scmp.ge.s32.totalorder %s17, 4
      %s24 = sphi 0, %s36
      %s25 = sphi 0, %s32
      %s26 = sphi 0, %s24
      %s27 = sphi 0, %s25
      %s28 = sphi 0, %s26
      %s29 = sphi 0, %s27
      %s41 = sphi 0, %s43
      %s44 = sphi 0, %s41
      %s45 = sphi 0, %s44
      %s61 = sphi 0, %s45
      %s69 = sphi 0, %s71
      %s72 = sphi 0, %s69
      %s73 = sphi 0, %s72
      %s89 = sphi 0, %s73
      %s97 = sphi 0, %s99
      %s100 = sphi 0, %s97
      %s101 = sphi 0, %s100
      %s117 = sphi 0, %s101
      %s121 = sphi 0, %s121
      %s123 = sphi 0, %s121
      %s124 = sphi 0, %s123
      %s138 = sphi 0, %s124
      %s142 = sphi 0, %s142
      %s144 = sphi 0, %s142
      %s145 = sphi 0, %s144
      %s159 = sphi 0, %s145
      %s163 = sphi 0, %s163
      %s165 = sphi 0, %s163
      %s166 = sphi 0, %s165
      %s180 = sphi 0, %s166
      %s184 = sphi 0, %s184
      %s186 = sphi 0, %s184
      %s187 = sphi 0, %s186
      %s201 = sphi 0, %s187
      %s205 = sphi 0, %s205
      %s207 = sphi 0, %s205
      %s208 = sphi 0, %s207
      %s222 = sphi 0, %s208
      %s228 = sphi 0, %s230
      %s231 = sphi 0, %s228
      %s232 = sphi 0, %s231
      %s248 = sphi 0, %s232
    $region4: #{tpu_custom_call.1} parent=1 // loop_header_branch
      %20 = sbr.rel (%p18) target = $region8
    $region5: #{tpu_custom_call.1} parent=1 // loop_body
      %s22 = ssub.s32 %s17, 1
      %s23 = ssub.s32 %s17, 2
      %s30 = sadd.s32 1, %s25
      %p31 = scmp.ge.s32.totalorder %s30, 1
      %s32 = scalar_select %p31, 0, %s30
      %s33 = sadd.s32 1, %s24
      %s34 = scalar_select %p31, %s33, %s24
      %p35 = scmp.ge.s32.totalorder %s34, 2
      %s36 = scalar_select %p35, 0, %s34
      %s37 = sadd.s32 %s24, %s25
      %s38 = sadd.s32 %s36, %s32
      %s39 = ssub.s32 %s37, %s38
      %p40 = scmp.eq.s32.totalorder %s39, 0
      %s42 = sadd.s32 %s41, 1
      %s43 = scalar_select %p40, %s41, %s42
      %p46 = pneg %p40
      %p47 = scmp.eq.s32.totalorder %s17, 1
      %p48 = por %p46, %p47
      %p49 = scmp.ne.s32.totalorder %s41, %s44
      %p50 = scmp.eq.s32.totalorder %s17, 0
      %p51 = por %p49, %p50
      %p52 = scmp.ne.s32.totalorder %s41, %s44
      %p53 = scmp.eq.s32.totalorder %s22, 1
      %p54 = por %p52, %p53
      %p55 = scmp.ne.s32.totalorder %s44, %s45
      %p56 = scmp.eq.s32.totalorder %s22, 0
      %p57 = por %p55, %p56
      %p58 = scmp.ne.s32.totalorder %s44, %s45
      %p59 = scmp.eq.s32.totalorder %s23, 1
      %p60 = por %p58, %p59
      %p62 = scmp.ne.s32.totalorder %s45, %s61
      %p63 = scmp.eq.s32.totalorder %s23, 0
      %p64 = por %p62, %p63
      %s65 = sadd.s32 %s24, %s25
      %s66 = sadd.s32 %s36, %s32
      %s67 = ssub.s32 %s65, %s66
      %p68 = scmp.eq.s32.totalorder %s67, 0
      %s70 = sadd.s32 %s69, 1
      %s71 = scalar_select %p68, %s69, %s70
      %p74 = pneg %p68
      %p75 = scmp.eq.s32.totalorder %s17, 1
      %p76 = por %p74, %p75
      %p77 = scmp.ne.s32.totalorder %s69, %s72
      %p78 = scmp.eq.s32.totalorder %s17, 0
      %p79 = por %p77, %p78
      %p80 = scmp.ne.s32.totalorder %s69, %s72
      %p81 = scmp.eq.s32.totalorder %s22, 1
      %p82 = por %p80, %p81
      %p83 = scmp.ne.s32.totalorder %s72, %s73
      %p84 = scmp.eq.s32.totalorder %s22, 0
      %p85 = por %p83, %p84
      %p86 = scmp.ne.s32.totalorder %s72, %s73
      %p87 = scmp.eq.s32.totalorder %s23, 1
      %p88 = por %p86, %p87
      %p90 = scmp.ne.s32.totalorder %s73, %s89
      %p91 = scmp.eq.s32.totalorder %s23, 0
      %p92 = por %p90, %p91
      %s93 = sadd.s32 %s24, %s25
      %s94 = sadd.s32 %s36, %s32
      %s95 = ssub.s32 %s93, %s94
      %p96 = scmp.eq.s32.totalorder %s95, 0
      %s98 = sadd.s32 %s97, 1
      %s99 = scalar_select %p96, %s97, %s98
      %p102 = pneg %p96
      %p103 = scmp.eq.s32.totalorder %s17, 1
      %p104 = por %p102, %p103
      %p105 = scmp.ne.s32.totalorder %s97, %s100
      %p106 = scmp.eq.s32.totalorder %s17, 0
      %p107 = por %p105, %p106
      %p108 = scmp.ne.s32.totalorder %s97, %s100
      %p109 = scmp.eq.s32.totalorder %s22, 1
      %p110 = por %p108, %p109
      %p111 = scmp.ne.s32.totalorder %s100, %s101
      %p112 = scmp.eq.s32.totalorder %s22, 0
      %p113 = por %p111, %p112
      %p114 = scmp.ne.s32.totalorder %s100, %s101
      %p115 = scmp.eq.s32.totalorder %s23, 1
      %p116 = por %p114, %p115
      %p118 = scmp.ne.s32.totalorder %s101, %s117
      %p119 = scmp.eq.s32.totalorder %s23, 0
      %p120 = por %p118, %p119
      %s122 = sadd.s32 %s121, 1
      %p125 = scmp.eq.s32.totalorder %s17, 1
      %p126 = scmp.ne.s32.totalorder %s121, %s123
      %p127 = scmp.eq.s32.totalorder %s17, 0
      %p128 = por %p126, %p127
      %p129 = scmp.ne.s32.totalorder %s121, %s123
      %p130 = scmp.eq.s32.totalorder %s22, 1
      %p131 = por %p129, %p130
      %p132 = scmp.ne.s32.totalorder %s123, %s124
      %p133 = scmp.eq.s32.totalorder %s22, 0
      %p134 = por %p132, %p133
      %p135 = scmp.ne.s32.totalorder %s123, %s124
      %p136 = scmp.eq.s32.totalorder %s23, 1
      %p137 = por %p135, %p136
      %p139 = scmp.ne.s32.totalorder %s124, %s138
      %p140 = scmp.eq.s32.totalorder %s23, 0
      %p141 = por %p139, %p140
      %s143 = sadd.s32 %s142, 1
      %p146 = scmp.eq.s32.totalorder %s17, 1
      %p147 = scmp.ne.s32.totalorder %s142, %s144
      %p148 = scmp.eq.s32.totalorder %s17, 0
      %p149 = por %p147, %p148
      %p150 = scmp.ne.s32.totalorder %s142, %s144
      %p151 = scmp.eq.s32.totalorder %s22, 1
      %p152 = por %p150, %p151
      %p153 = scmp.ne.s32.totalorder %s144, %s145
      %p154 = scmp.eq.s32.totalorder %s22, 0
      %p155 = por %p153, %p154
      %p156 = scmp.ne.s32.totalorder %s144, %s145
      %p157 = scmp.eq.s32.totalorder %s23, 1
      %p158 = por %p156, %p157
      %p160 = scmp.ne.s32.totalorder %s145, %s159
      %p161 = scmp.eq.s32.totalorder %s23, 0
      %p162 = por %p160, %p161
      %s164 = sadd.s32 %s163, 1
      %p167 = scmp.eq.s32.totalorder %s17, 1
      %p168 = scmp.ne.s32.totalorder %s163, %s165
      %p169 = scmp.eq.s32.totalorder %s17, 0
      %p170 = por %p168, %p169
      %p171 = scmp.ne.s32.totalorder %s163, %s165
      %p172 = scmp.eq.s32.totalorder %s22, 1
      %p173 = por %p171, %p172
      %p174 = scmp.ne.s32.totalorder %s165, %s166
      %p175 = scmp.eq.s32.totalorder %s22, 0
      %p176 = por %p174, %p175
      %p177 = scmp.ne.s32.totalorder %s165, %s166
      %p178 = scmp.eq.s32.totalorder %s23, 1
      %p179 = por %p177, %p178
      %p181 = scmp.ne.s32.totalorder %s166, %s180
      %p182 = scmp.eq.s32.totalorder %s23, 0
      %p183 = por %p181, %p182
      %s185 = sadd.s32 %s184, 1
      %p188 = scmp.eq.s32.totalorder %s17, 1
      %p189 = scmp.ne.s32.totalorder %s184, %s186
      %p190 = scmp.eq.s32.totalorder %s17, 0
      %p191 = por %p189, %p190
      %p192 = scmp.ne.s32.totalorder %s184, %s186
      %p193 = scmp.eq.s32.totalorder %s22, 1
      %p194 = por %p192, %p193
      %p195 = scmp.ne.s32.totalorder %s186, %s187
      %p196 = scmp.eq.s32.totalorder %s22, 0
      %p197 = por %p195, %p196
      %p198 = scmp.ne.s32.totalorder %s186, %s187
      %p199 = scmp.eq.s32.totalorder %s23, 1
      %p200 = por %p198, %p199
      %p202 = scmp.ne.s32.totalorder %s187, %s201
      %p203 = scmp.eq.s32.totalorder %s23, 0
      %p204 = por %p202, %p203
      %s206 = sadd.s32 %s205, 1
      %p209 = scmp.eq.s32.totalorder %s17, 1
      %p210 = scmp.ne.s32.totalorder %s205, %s207
      %p211 = scmp.eq.s32.totalorder %s17, 0
      %p212 = por %p210, %p211
      %p213 = scmp.ne.s32.totalorder %s205, %s207
      %p214 = scmp.eq.s32.totalorder %s22, 1
      %p215 = por %p213, %p214
      %p216 = scmp.ne.s32.totalorder %s207, %s208
      %p217 = scmp.eq.s32.totalorder %s22, 0
      %p218 = por %p216, %p217
      %p219 = scmp.ne.s32.totalorder %s207, %s208
      %p220 = scmp.eq.s32.totalorder %s23, 1
      %p221 = por %p219, %p220
      %p223 = scmp.ne.s32.totalorder %s208, %s222
      %p224 = scmp.eq.s32.totalorder %s23, 0
      %p225 = por %p223, %p224
      %s226 = ssub.s32 %s24, %s36
      %p227 = scmp.eq.s32.totalorder %s226, 0
      %s229 = sadd.s32 %s228, 1
      %s230 = scalar_select %p227, %s228, %s229
      %p233 = pneg %p227
      %p234 = scmp.eq.s32.totalorder %s17, 1
      %p235 = por %p233, %p234
      %p236 = scmp.ne.s32.totalorder %s228, %s231
      %p237 = scmp.eq.s32.totalorder %s17, 0
      %p238 = por %p236, %p237
      %p239 = scmp.ne.s32.totalorder %s228, %s231
      %p240 = scmp.eq.s32.totalorder %s22, 1
      %p241 = por %p239, %p240
      %p242 = scmp.ne.s32.totalorder %s231, %s232
      %p243 = scmp.eq.s32.totalorder %s22, 0
      %p244 = por %p242, %p243
      %p245 = scmp.ne.s32.totalorder %s231, %s232
      %p246 = scmp.eq.s32.totalorder %s23, 1
      %p247 = por %p245, %p246
      %p249 = scmp.ne.s32.totalorder %s232, %s248
      %p250 = scmp.eq.s32.totalorder %s23, 0
      %p251 = por %p249, %p250
      %p252 = scmp.le.s32.totalorder 1, %s17
      %p253 = scmp.lt.s32.totalorder %s17, 3
      %p254 = pnand %p252, %p253
      %p255 = pneg %p254
      // Predicated region
      $region9: #{tpu_custom_call.1} parent=5 // pred_check
        _
      $region10: #{tpu_custom_call.1} parent=5 // pred_check_branch
        %257 = sbr.rel (%p254) target = $region12
      $region11: #{tpu_custom_call.1} parent=5 // pred_region
        %s258 = ssub.s32 %s17, 1
        // Predicated region
        $region13: #{tpu_custom_call.1} parent=11 // pred_check
          %p259 = pneg %p134
        $region14: #{tpu_custom_call.1} parent=11 // pred_check_branch
          %261 = sbr.rel (%p259) target = $region16
        $region15: #{tpu_custom_call.1} parent=11 // pred_region
          _
        $region16: #{tpu_custom_call.1} parent=11 // pred_fallthru
          _
        // Predicated region
        $region17: #{tpu_custom_call.1} parent=11 // pred_check
          %p262 = pneg %p155
        $region18: #{tpu_custom_call.1} parent=11 // pred_check_branch
          %264 = sbr.rel (%p262) target = $region20
        $region19: #{tpu_custom_call.1} parent=11 // pred_region
          _
        $region20: #{tpu_custom_call.1} parent=11 // pred_fallthru
          _
        // Predicated region
        $region21: #{tpu_custom_call.1} parent=11 // pred_check
          %p265 = pneg %p176
        $region22: #{tpu_custom_call.1} parent=11 // pred_check_branch
          %267 = sbr.rel (%p265) target = $region24
        $region23: #{tpu_custom_call.1} parent=11 // pred_region
          _
        $region24: #{tpu_custom_call.1} parent=11 // pred_fallthru
          _
        // Predicated region
        $region25: #{tpu_custom_call.1} parent=11 // pred_check
          %p268 = pneg %p197
        $region26: #{tpu_custom_call.1} parent=11 // pred_check_branch
          %270 = sbr.rel (%p268) target = $region28
        $region27: #{tpu_custom_call.1} parent=11 // pred_region
          _
        $region28: #{tpu_custom_call.1} parent=11 // pred_fallthru
          _
        // Predicated region
        $region29: #{tpu_custom_call.1} parent=11 // pred_check
          %p271 = pneg %p218
        $region30: #{tpu_custom_call.1} parent=11 // pred_check_branch
          %273 = sbr.rel (%p271) target = $region32
        $region31: #{tpu_custom_call.1} parent=11 // pred_region
          _
        $region32: #{tpu_custom_call.1} parent=11 // pred_fallthru
          _
      $region12: #{tpu_custom_call.1} parent=5 // pred_fallthru
        _
      %p274 = scmp.lt.s32.totalorder %s17, 2
      // Predicated region
      $region33: #{tpu_custom_call.1} parent=5 // pred_check
        %p275 = pneg %p274
      $region34: #{tpu_custom_call.1} parent=5 // pred_check_branch
        %277 = sbr.rel (%p275) target = $region36
      $region35: #{tpu_custom_call.1} parent=5 // pred_region
        // Predicated region
        $region37: #{tpu_custom_call.1} parent=35 // pred_check
          %p278 = pneg %p51
        $region38: #{tpu_custom_call.1} parent=35 // pred_check_branch
          %280 = sbr.rel (%p278) target = $region40
        $region39: #{tpu_custom_call.1} parent=35 // pred_region
          %s281 = sadd.s32 %s24, %s25
          %s282 = smul.u32 32, %s281
          %p283 = scmp.lt.s32.totalorder %s282, 63
          %s284 = scalar_select %p283, %s282, 63
          %s285 = smul.addr %s284, 8
          %s286 = scalar_lea.vmem %s0, %s285
          %s287 = sadd.s32 %s24, %s25
          %s288 = smul.u32 32, %s287
        $region40: #{tpu_custom_call.1} parent=35 // pred_fallthru
          _
        // Predicated region
        $region41: #{tpu_custom_call.1} parent=35 // pred_check
          %p289 = pneg %p79
        $region42: #{tpu_custom_call.1} parent=35 // pred_check_branch
          %291 = sbr.rel (%p289) target = $region44
        $region43: #{tpu_custom_call.1} parent=35 // pred_region
          %s292 = sadd.s32 %s24, %s25
          %s293 = smul.u32 32, %s292
          %p294 = scmp.lt.s32.totalorder %s293, 63
          %s295 = scalar_select %p294, %s293, 63
          %s296 = smul.addr %s295, 8
          %s297 = scalar_lea.vmem %s1, %s296
          %s298 = sadd.s32 %s24, %s25
          %s299 = smul.u32 32, %s298
        $region44: #{tpu_custom_call.1} parent=35 // pred_fallthru
          _
        // Predicated region
        $region45: #{tpu_custom_call.1} parent=35 // pred_check
          %p300 = pneg %p107
        $region46: #{tpu_custom_call.1} parent=35 // pred_check_branch
          %302 = sbr.rel (%p300) target = $region48
        $region47: #{tpu_custom_call.1} parent=35 // pred_region
          %s303 = sadd.s32 %s24, %s25
          %s304 = smul.u32 2, %s303
          %p305 = scmp.lt.s32.totalorder %s304, 3
          %s306 = scalar_select %p305, %s304, 3
          %s307 = scalar_lea.vmem %s2, %s306
          %s308 = sadd.s32 %s24, %s25
          %s309 = smul.u32 2, %s308
        $region48: #{tpu_custom_call.1} parent=35 // pred_fallthru
          _
      $region36: #{tpu_custom_call.1} parent=5 // pred_fallthru
        _
      %p310 = scmp.le.s32.totalorder 1, %s17
      %p311 = scmp.lt.s32.totalorder %s17, 3
      %p312 = pnand %p310, %p311
      %p313 = pneg %p312
      // Predicated region
      $region49: #{tpu_custom_call.1} parent=5 // pred_check
        _
      $region50: #{tpu_custom_call.1} parent=5 // pred_check_branch
        %315 = sbr.rel (%p312) target = $region52
      $region51: #{tpu_custom_call.1} parent=5 // pred_region
        %s316 = ssub.s32 %s17, 1
        %s317 = sadd.s32 %s26, %s27
        %s318 = smul.u32 32, %s317
        %p319 = scmp.lt.s32.totalorder %s318, 63
        %s320 = scalar_select %p319, %s318, 63
        %s321 = smul.addr %s320, 8
        %s322 = scalar_lea.vmem %s0, %s321
        %p323 = pneg %p57
        %p324 = pneg %p54
        %s325 = sadd.s32 %s26, %s27
        %s326 = smul.u32 32, %s325
        %p327 = scmp.lt.s32.totalorder %s326, 63
        %s328 = scalar_select %p327, %s326, 63
        %s329 = smul.addr %s328, 8
        %s330 = scalar_lea.vmem %s1, %s329
        %p331 = pneg %p85
        %p332 = pneg %p82
        %s333 = sadd.s32 %s26, %s27
        %s334 = smul.u32 2, %s333
        %p335 = scmp.lt.s32.totalorder %s334, 3
        %s336 = scalar_select %p335, %s334, 3
        %s337 = scalar_lea.vmem %s2, %s336
        %p338 = pneg %p113
        %p339 = pneg %p110
        %p340 = pneg %p134
        %p341 = pneg %p131
        %p342 = pneg %p155
        %p343 = pneg %p152
        %p344 = pneg %p176
        %p345 = pneg %p173
        %p346 = pneg %p197
        %p347 = pneg %p194
        %p348 = pneg %p218
        %p349 = pneg %p215
        %p350 = pneg %p244
        %p351 = pneg %p241
        %s352 = sand.u32 %s231, 1
        %s353 = scalar_lea.sflag [#allocation3], %s352
        %s354 = sand.u32 %s231, 1
        %s355 = smul.addr %s354, 16
        %s356 = scalar_lea.vmem [#allocation2], %s355
        %s357 = sadd.s32 %s26, %s27
        %s358 = smul.u32 32, %s357
        %p359 = scmp.lt.s32.totalorder %s358, 63
        %s360 = scalar_select %p359, %s358, 63
        %s361 = smul.addr %s360, 8
        %s362 = scalar_lea.vmem %s0, %s361
        %s363 = sadd.s32 %s26, %s27
        %s364 = smul.u32 32, %s363
        %s365 = sadd.s32 %s26, %s27
        %s366 = smul.u32 32, %s365
        %p367 = scmp.lt.s32.totalorder %s366, 63
        %s368 = scalar_select %p367, %s366, 63
        %s369 = smul.addr %s368, 8
        %s370 = scalar_lea.vmem %s1, %s369
        %s371 = sadd.s32 %s26, %s27
        %s372 = smul.u32 32, %s371
        %s373 = sadd.s32 %s26, %s27
        %s374 = smul.u32 2, %s373
        %p375 = scmp.lt.s32.totalorder %s374, 3
        %s376 = scalar_select %p375, %s374, 3
        %s377 = scalar_lea.vmem %s2, %s376
        %s378 = sadd.s32 %s26, %s27
        %s379 = smul.u32 2, %s378
        %p381 = scmp.eq.s32.totalorder %s27, 0
        // Predicated region
        $region53: #{tpu_custom_call.1} parent=51 // pred_check
          %p382 = pneg %p381
        $region54: #{tpu_custom_call.1} parent=51 // pred_check_branch
          %384 = sbr.rel (%p382) target = $region56
        $region55: #{tpu_custom_call.1} parent=51 // pred_region
          %385 = vst [vmem:[%s356] sm:$0xff] 0.0
          %386 = vst [vmem:[%s356 + $0x8] sm:$0xff] 0.0
        $region56: #{tpu_custom_call.1} parent=51 // pred_fallthru
          _
        %v387 = vlaneseq
        %v388 = vand.u32 %v387, 127
        %v389 = vld [vmem:[%s370] sm:$0xff]
        %v390 = vld [vmem:[%s370 + $0x8] sm:$0xff]
        %v391 = vld [vmem:[%s370 + $0x10] sm:$0xff]
        %v392 = vld [vmem:[%s370 + $0x18] sm:$0xff]
        %v393 = vld [vmem:[%s370 + $0x20] sm:$0xff]
        %v394 = vld [vmem:[%s370 + $0x28] sm:$0xff]
        %v395 = vld [vmem:[%s370 + $0x30] sm:$0xff]
        %v396 = vld [vmem:[%s370 + $0x38] sm:$0xff]
        %v397 = vld [vmem:[%s370 + $0x40] sm:$0xff]
        %v398 = vld [vmem:[%s370 + $0x48] sm:$0xff]
        %v399 = vld [vmem:[%s370 + $0x50] sm:$0xff]
        %v400 = vld [vmem:[%s370 + $0x58] sm:$0xff]
        %v401 = vld [vmem:[%s370 + $0x60] sm:$0xff]
        %v402 = vld [vmem:[%s370 + $0x68] sm:$0xff]
        %v403 = vld [vmem:[%s370 + $0x70] sm:$0xff]
        %v404 = vld [vmem:[%s370 + $0x78] sm:$0xff]
        %v405 = vld [vmem:[%s370 + $0x80] sm:$0xff]
        %v406 = vld [vmem:[%s370 + $0x88] sm:$0xff]
        %v407 = vld [vmem:[%s370 + $0x90] sm:$0xff]
        %v408 = vld [vmem:[%s370 + $0x98] sm:$0xff]
        %v409 = vld [vmem:[%s370 + $0xa0] sm:$0xff]
        %v410 = vld [vmem:[%s370 + $0xa8] sm:$0xff]
        %v411 = vld [vmem:[%s370 + $0xb0] sm:$0xff]
        %v412 = vld [vmem:[%s370 + $0xb8] sm:$0xff]
        %v413 = vld [vmem:[%s370 + $0xc0] sm:$0xff]
        %v414 = vld [vmem:[%s370 + $0xc8] sm:$0xff]
        %v415 = vld [vmem:[%s370 + $0xd0] sm:$0xff]
        %v416 = vld [vmem:[%s370 + $0xd8] sm:$0xff]
        %v417 = vld [vmem:[%s370 + $0xe0] sm:$0xff]
        %v418 = vld [vmem:[%s370 + $0xe8] sm:$0xff]
        %v419 = vld [vmem:[%s370 + $0xf0] sm:$0xff]
        %v420 = vld [vmem:[%s370 + $0xf8] sm:$0xff]
        %421 = vset.pattern.permute.xlu0 0
        %422 = vperm.xlu0 %421, %v389
        %v423 = vpop.permute.xlu0 %422
        %424 = vset.pattern.permute.xlu0 0
        %425 = vperm.xlu0 %424, %v390
        %v426 = vpop.permute.xlu0 %425
        %427 = vset.pattern.permute.xlu0 0
        %428 = vperm.xlu0 %427, %v391
        %v429 = vpop.permute.xlu0 %428
        %430 = vset.pattern.permute.xlu0 0
        %431 = vperm.xlu0 %430, %v392
        %v432 = vpop.permute.xlu0 %431
        %433 = vset.pattern.permute.xlu0 0
        %434 = vperm.xlu0 %433, %v393
        %v435 = vpop.permute.xlu0 %434
        %436 = vset.pattern.permute.xlu0 0
        %437 = vperm.xlu0 %436, %v394
        %v438 = vpop.permute.xlu0 %437
        %439 = vset.pattern.permute.xlu0 0
        %440 = vperm.xlu0 %439, %v395
        %v441 = vpop.permute.xlu0 %440
        %442 = vset.pattern.permute.xlu0 0
        %443 = vperm.xlu0 %442, %v396
        %v444 = vpop.permute.xlu0 %443
        %445 = vset.pattern.permute.xlu0 0
        %446 = vperm.xlu0 %445, %v397
        %v447 = vpop.permute.xlu0 %446
        %448 = vset.pattern.permute.xlu0 0
        %449 = vperm.xlu0 %448, %v398
        %v450 = vpop.permute.xlu0 %449
        %451 = vset.pattern.permute.xlu0 0
        %452 = vperm.xlu0 %451, %v399
        %v453 = vpop.permute.xlu0 %452
        %454 = vset.pattern.permute.xlu0 0
        %455 = vperm.xlu0 %454, %v400
        %v456 = vpop.permute.xlu0 %455
        %457 = vset.pattern.permute.xlu0 0
        %458 = vperm.xlu0 %457, %v401
        %v459 = vpop.permute.xlu0 %458
        %460 = vset.pattern.permute.xlu0 0
        %461 = vperm.xlu0 %460, %v402
        %v462 = vpop.permute.xlu0 %461
        %463 = vset.pattern.permute.xlu0 0
        %464 = vperm.xlu0 %463, %v403
        %v465 = vpop.permute.xlu0 %464
        %466 = vset.pattern.permute.xlu0 0
        %467 = vperm.xlu0 %466, %v404
        %v468 = vpop.permute.xlu0 %467
        %469 = vset.pattern.permute.xlu0 0
        %470 = vperm.xlu0 %469, %v405
        %v471 = vpop.permute.xlu0 %470
        %472 = vset.pattern.permute.xlu0 0
        %473 = vperm.xlu0 %472, %v406
        %v474 = vpop.permute.xlu0 %473
        %475 = vset.pattern.permute.xlu0 0
        %476 = vperm.xlu0 %475, %v407
        %v477 = vpop.permute.xlu0 %476
        %478 = vset.pattern.permute.xlu0 0
        %479 = vperm.xlu0 %478, %v408
        %v480 = vpop.permute.xlu0 %479
        %481 = vset.pattern.permute.xlu0 0
        %482 = vperm.xlu0 %481, %v409
        %v483 = vpop.permute.xlu0 %482
        %484 = vset.pattern.permute.xlu0 0
        %485 = vperm.xlu0 %484, %v410
        %v486 = vpop.permute.xlu0 %485
        %487 = vset.pattern.permute.xlu0 0
        %488 = vperm.xlu0 %487, %v411
        %v489 = vpop.permute.xlu0 %488
        %490 = vset.pattern.permute.xlu0 0
        %491 = vperm.xlu0 %490, %v412
        %v492 = vpop.permute.xlu0 %491
        %493 = vset.pattern.permute.xlu0 0
        %494 = vperm.xlu0 %493, %v413
        %v495 = vpop.permute.xlu0 %494
        %496 = vset.pattern.permute.xlu0 0
        %497 = vperm.xlu0 %496, %v414
        %v498 = vpop.permute.xlu0 %497
        %499 = vset.pattern.permute.xlu0 0
        %500 = vperm.xlu0 %499, %v415
        %v501 = vpop.permute.xlu0 %500
        %502 = vset.pattern.permute.xlu0 0
        %503 = vperm.xlu0 %502, %v416
        %v504 = vpop.permute.xlu0 %503
        %505 = vset.pattern.permute.xlu0 0
        %506 = vperm.xlu0 %505, %v417
        %v507 = vpop.permute.xlu0 %506
        %508 = vset.pattern.permute.xlu0 0
        %509 = vperm.xlu0 %508, %v418
        %v510 = vpop.permute.xlu0 %509
        %511 = vset.pattern.permute.xlu0 0
        %512 = vperm.xlu0 %511, %v419
        %v513 = vpop.permute.xlu0 %512
        %514 = vset.pattern.permute.xlu0 0
        %515 = vperm.xlu0 %514, %v420
        %v516 = vpop.permute.xlu0 %515
        %vm517 = vcmp.eq.s32.totalorder %v388, %v423
        %vm518 = vcmp.eq.s32.totalorder %v388, %v426
        %vm519 = vcmp.eq.s32.totalorder %v388, %v429
        %vm520 = vcmp.eq.s32.totalorder %v388, %v432
        %vm521 = vcmp.eq.s32.totalorder %v388, %v435
        %vm522 = vcmp.eq.s32.totalorder %v388, %v438
        %vm523 = vcmp.eq.s32.totalorder %v388, %v441
        %vm524 = vcmp.eq.s32.totalorder %v388, %v444
        %vm525 = vcmp.eq.s32.totalorder %v388, %v447
        %vm526 = vcmp.eq.s32.totalorder %v388, %v450
        %vm527 = vcmp.eq.s32.totalorder %v388, %v453
        %vm528 = vcmp.eq.s32.totalorder %v388, %v456
        %vm529 = vcmp.eq.s32.totalorder %v388, %v459
        %vm530 = vcmp.eq.s32.totalorder %v388, %v462
        %vm531 = vcmp.eq.s32.totalorder %v388, %v465
        %vm532 = vcmp.eq.s32.totalorder %v388, %v468
        %vm533 = vcmp.eq.s32.totalorder %v388, %v471
        %vm534 = vcmp.eq.s32.totalorder %v388, %v474
        %vm535 = vcmp.eq.s32.totalorder %v388, %v477
        %vm536 = vcmp.eq.s32.totalorder %v388, %v480
        %vm537 = vcmp.eq.s32.totalorder %v388, %v483
        %vm538 = vcmp.eq.s32.totalorder %v388, %v486
        %vm539 = vcmp.eq.s32.totalorder %v388, %v489
        %vm540 = vcmp.eq.s32.totalorder %v388, %v492
        %vm541 = vcmp.eq.s32.totalorder %v388, %v495
        %vm542 = vcmp.eq.s32.totalorder %v388, %v498
        %vm543 = vcmp.eq.s32.totalorder %v388, %v501
        %vm544 = vcmp.eq.s32.totalorder %v388, %v504
        %vm545 = vcmp.eq.s32.totalorder %v388, %v507
        %vm546 = vcmp.eq.s32.totalorder %v388, %v510
        %vm547 = vcmp.eq.s32.totalorder %v388, %v513
        %vm548 = vcmp.eq.s32.totalorder %v388, %v516
        %v549 = vsel %vm517, 1, 0
        %v550 = vsel %vm518, 1, 0
        %v551 = vsel %vm519, 1, 0
        %v552 = vsel %vm520, 1, 0
        %v553 = vsel %vm521, 1, 0
        %v554 = vsel %vm522, 1, 0
        %v555 = vsel %vm523, 1, 0
        %v556 = vsel %vm524, 1, 0
        %v557 = vsel %vm525, 1, 0
        %v558 = vsel %vm526, 1, 0
        %v559 = vsel %vm527, 1, 0
        %v560 = vsel %vm528, 1, 0
        %v561 = vsel %vm529, 1, 0
        %v562 = vsel %vm530, 1, 0
        %v563 = vsel %vm531, 1, 0
        %v564 = vsel %vm532, 1, 0
        %v565 = vsel %vm533, 1, 0
        %v566 = vsel %vm534, 1, 0
        %v567 = vsel %vm535, 1, 0
        %v568 = vsel %vm536, 1, 0
        %v569 = vsel %vm537, 1, 0
        %v570 = vsel %vm538, 1, 0
        %v571 = vsel %vm539, 1, 0
        %v572 = vsel %vm540, 1, 0
        %v573 = vsel %vm541, 1, 0
        %v574 = vsel %vm542, 1, 0
        %v575 = vsel %vm543, 1, 0
        %v576 = vsel %vm544, 1, 0
        %v577 = vsel %vm545, 1, 0
        %v578 = vsel %vm546, 1, 0
        %v579 = vsel %vm547, 1, 0
        %v580 = vsel %vm548, 1, 0
        %v581 = vcvt.s32.f32 %v549
        %v582 = vcvt.s32.f32 %v550
        %v583 = vcvt.s32.f32 %v551
        %v584 = vcvt.s32.f32 %v552
        %v585 = vcvt.s32.f32 %v553
        %v586 = vcvt.s32.f32 %v554
        %v587 = vcvt.s32.f32 %v555
        %v588 = vcvt.s32.f32 %v556
        %v589 = vcvt.s32.f32 %v557
        %v590 = vcvt.s32.f32 %v558
        %v591 = vcvt.s32.f32 %v559
        %v592 = vcvt.s32.f32 %v560
        %v593 = vcvt.s32.f32 %v561
        %v594 = vcvt.s32.f32 %v562
        %v595 = vcvt.s32.f32 %v563
        %v596 = vcvt.s32.f32 %v564
        %v597 = vcvt.s32.f32 %v565
        %v598 = vcvt.s32.f32 %v566
        %v599 = vcvt.s32.f32 %v567
        %v600 = vcvt.s32.f32 %v568
        %v601 = vcvt.s32.f32 %v569
        %v602 = vcvt.s32.f32 %v570
        %v603 = vcvt.s32.f32 %v571
        %v604 = vcvt.s32.f32 %v572
        %v605 = vcvt.s32.f32 %v573
        %v606 = vcvt.s32.f32 %v574
        %v607 = vcvt.s32.f32 %v575
        %v608 = vcvt.s32.f32 %v576
        %v609 = vcvt.s32.f32 %v577
        %v610 = vcvt.s32.f32 %v578
        %v611 = vcvt.s32.f32 %v579
        %v612 = vcvt.s32.f32 %v580
        %v613 = vpack.c.bf16 %v582, %v581
        %v614 = vpack.c.bf16 %v584, %v583
        %v615 = vpack.c.bf16 %v586, %v585
        %v616 = vpack.c.bf16 %v588, %v587
        %v617 = vpack.c.bf16 %v590, %v589
        %v618 = vpack.c.bf16 %v592, %v591
        %v619 = vpack.c.bf16 %v594, %v593
        %v620 = vpack.c.bf16 %v596, %v595
        %v621 = vpack.c.bf16 %v598, %v597
        %v622 = vpack.c.bf16 %v600, %v599
        %v623 = vpack.c.bf16 %v602, %v601
        %v624 = vpack.c.bf16 %v604, %v603
        %v625 = vpack.c.bf16 %v606, %v605
        %v626 = vpack.c.bf16 %v608, %v607
        %v627 = vpack.c.bf16 %v610, %v609
        %v628 = vpack.c.bf16 %v612, %v611
        %v629 = vld [vmem:[%s3] sm:$0xf]
        %v630 = vld [vmem:[%s3 + $0x4] sm:$0xf]
        %v633 = vunpack.c.l.b16 %v629
        %v634 = vunpack.c.l.b16 %v630
        %v635 = vpack.c.b16 %v634, %v633
        %vm637 = vcmask 130048
        %v639 = vsel %vm637, %v613, 0
        %v642 = vsel %vm637, %v614, 0
        %v645 = vsel %vm637, %v615, 0
        %v648 = vsel %vm637, %v616, 0
        %v651 = vsel %vm637, %v617, 0
        %v654 = vsel %vm637, %v618, 0
        %v657 = vsel %vm637, %v619, 0
        %v660 = vsel %vm637, %v620, 0
        %v663 = vsel %vm637, %v621, 0
        %v666 = vsel %vm637, %v622, 0
        %v669 = vsel %vm637, %v623, 0
        %v672 = vsel %vm637, %v624, 0
        %v675 = vsel %vm637, %v625, 0
        %v678 = vsel %vm637, %v626, 0
        %v681 = vsel %vm637, %v627, 0
        %v684 = vsel %vm637, %v628, 0
        %686 = vmatpush.bf16.msra.mxu0 0
        %687 = vmatpush.bf16.msra.mxu0 0
        %688 = vmatpush.bf16.msra.mxu0 0
        %689 = vmatpush.bf16.msra.mxu0 0
        %690 = vmatpush.bf16.msra.mxu0 0
        %691 = vmatpush.bf16.msra.mxu0 0
        %692 = vmatpush.bf16.msra.mxu0 0
        %693 = vmatpush.bf16.msra.mxu0 %v635
        %694 = vmatmul.bf16.gmra.mxu0 %v639
        %v695 = vpop.f32.mrf.mxu0
        %v696 = vadd.f32 0.0, %v695
        %v697 = vpop.f32.mrf.mxu0
        %v698 = vadd.f32 0.0, %v697
        %699 = vmatmul.bf16.gmra.mxu0 %v642
        %v700 = vpop.f32.mrf.mxu0
        %v701 = vadd.f32 0.0, %v700
        %v702 = vpop.f32.mrf.mxu0
        %v703 = vadd.f32 0.0, %v702
        %704 = vmatmul.bf16.gmra.mxu0 %v645
        %v705 = vpop.f32.mrf.mxu0
        %v706 = vadd.f32 0.0, %v705
        %v707 = vpop.f32.mrf.mxu0
        %v708 = vadd.f32 0.0, %v707
        %709 = vmatmul.bf16.gmra.mxu0 %v648
        %v710 = vpop.f32.mrf.mxu0
        %v711 = vadd.f32 0.0, %v710
        %v712 = vpop.f32.mrf.mxu0
        %v713 = vadd.f32 0.0, %v712
        %714 = vmatmul.bf16.gmra.mxu0 %v651
        %v715 = vpop.f32.mrf.mxu0
        %v716 = vadd.f32 0.0, %v715
        %v717 = vpop.f32.mrf.mxu0
        %v718 = vadd.f32 0.0, %v717
        %719 = vmatmul.bf16.gmra.mxu0 %v654
        %v720 = vpop.f32.mrf.mxu0
        %v721 = vadd.f32 0.0, %v720
        %v722 = vpop.f32.mrf.mxu0
        %v723 = vadd.f32 0.0, %v722
        %724 = vmatmul.bf16.gmra.mxu0 %v657
        %v725 = vpop.f32.mrf.mxu0
        %v726 = vadd.f32 0.0, %v725
        %v727 = vpop.f32.mrf.mxu0
        %v728 = vadd.f32 0.0, %v727
        %729 = vmatmul.bf16.gmra.mxu0 %v660
        %v730 = vpop.f32.mrf.mxu0
        %v731 = vadd.f32 0.0, %v730
        %v732 = vpop.f32.mrf.mxu0
        %v733 = vadd.f32 0.0, %v732
        %734 = vmatmul.bf16.gmra.mxu0 %v663
        %v735 = vpop.f32.mrf.mxu0
        %v736 = vadd.f32 0.0, %v735
        %v737 = vpop.f32.mrf.mxu0
        %v738 = vadd.f32 0.0, %v737
        %739 = vmatmul.bf16.gmra.mxu0 %v666
        %v740 = vpop.f32.mrf.mxu0
        %v741 = vadd.f32 0.0, %v740
        %v742 = vpop.f32.mrf.mxu0
        %v743 = vadd.f32 0.0, %v742
        %744 = vmatmul.bf16.gmra.mxu0 %v669
        %v745 = vpop.f32.mrf.mxu0
        %v746 = vadd.f32 0.0, %v745
        %v747 = vpop.f32.mrf.mxu0
        %v748 = vadd.f32 0.0, %v747
        %749 = vmatmul.bf16.gmra.mxu0 %v672
        %v750 = vpop.f32.mrf.mxu0
        %v751 = vadd.f32 0.0, %v750
        %v752 = vpop.f32.mrf.mxu0
        %v753 = vadd.f32 0.0, %v752
        %754 = vmatmul.bf16.gmra.mxu0 %v675
        %v755 = vpop.f32.mrf.mxu0
        %v756 = vadd.f32 0.0, %v755
        %v757 = vpop.f32.mrf.mxu0
        %v758 = vadd.f32 0.0, %v757
        %759 = vmatmul.bf16.gmra.mxu0 %v678
        %v760 = vpop.f32.mrf.mxu0
        %v761 = vadd.f32 0.0, %v760
        %v762 = vpop.f32.mrf.mxu0
        %v763 = vadd.f32 0.0, %v762
        %764 = vmatmul.bf16.gmra.mxu0 %v681
        %v765 = vpop.f32.mrf.mxu0
        %v766 = vadd.f32 0.0, %v765
        %v767 = vpop.f32.mrf.mxu0
        %v768 = vadd.f32 0.0, %v767
        %769 = vmatmul.bf16.gmra.mxu0 %v684
        %v770 = vpop.f32.mrf.mxu0
        %v771 = vadd.f32 0.0, %v770
        %v772 = vpop.f32.mrf.mxu0
        %v773 = vadd.f32 0.0, %v772
        %774 = vdwg.mxu0
        %v775 = vld [vmem:[%s362] sm:$0xff]
        %v776 = vld [vmem:[%s362 + $0x8] sm:$0xff]
        %v777 = vld [vmem:[%s362 + $0x10] sm:$0xff]
        %v778 = vld [vmem:[%s362 + $0x18] sm:$0xff]
        %v779 = vld [vmem:[%s362 + $0x20] sm:$0xff]
        %v780 = vld [vmem:[%s362 + $0x28] sm:$0xff]
        %v781 = vld [vmem:[%s362 + $0x30] sm:$0xff]
        %v782 = vld [vmem:[%s362 + $0x38] sm:$0xff]
        %v783 = vld [vmem:[%s362 + $0x40] sm:$0xff]
        %v784 = vld [vmem:[%s362 + $0x48] sm:$0xff]
        %v785 = vld [vmem:[%s362 + $0x50] sm:$0xff]
        %v786 = vld [vmem:[%s362 + $0x58] sm:$0xff]
        %v787 = vld [vmem:[%s362 + $0x60] sm:$0xff]
        %v788 = vld [vmem:[%s362 + $0x68] sm:$0xff]
        %v789 = vld [vmem:[%s362 + $0x70] sm:$0xff]
        %v790 = vld [vmem:[%s362 + $0x78] sm:$0xff]
        %v791 = vld [vmem:[%s362 + $0x80] sm:$0xff]
        %v792 = vld [vmem:[%s362 + $0x88] sm:$0xff]
        %v793 = vld [vmem:[%s362 + $0x90] sm:$0xff]
        %v794 = vld [vmem:[%s362 + $0x98] sm:$0xff]
        %v795 = vld [vmem:[%s362 + $0xa0] sm:$0xff]
        %v796 = vld [vmem:[%s362 + $0xa8] sm:$0xff]
        %v797 = vld [vmem:[%s362 + $0xb0] sm:$0xff]
        %v798 = vld [vmem:[%s362 + $0xb8] sm:$0xff]
        %v799 = vld [vmem:[%s362 + $0xc0] sm:$0xff]
        %v800 = vld [vmem:[%s362 + $0xc8] sm:$0xff]
        %v801 = vld [vmem:[%s362 + $0xd0] sm:$0xff]
        %v802 = vld [vmem:[%s362 + $0xd8] sm:$0xff]
        %v803 = vld [vmem:[%s362 + $0xe0] sm:$0xff]
        %v804 = vld [vmem:[%s362 + $0xe8] sm:$0xff]
        %v805 = vld [vmem:[%s362 + $0xf0] sm:$0xff]
        %v806 = vld [vmem:[%s362 + $0xf8] sm:$0xff]
        %v807 = vld [vmem:[%s4] sm:$0x1]
        %809 = vset.pattern.permute.xlu0 0
        %810 = vperm.xlu0 %809, %v775
        %v811 = vpop.permute.xlu0 %810
        %814 = vset.pattern.permute.xlu0 0
        %815 = vperm.xlu0 %814, %v776
        %v816 = vpop.permute.xlu0 %815
        %819 = vset.pattern.permute.xlu0 0
        %820 = vperm.xlu0 %819, %v777
        %v821 = vpop.permute.xlu0 %820
        %824 = vset.pattern.permute.xlu0 0
        %825 = vperm.xlu0 %824, %v778
        %v826 = vpop.permute.xlu0 %825
        %829 = vset.pattern.permute.xlu0 0
        %830 = vperm.xlu0 %829, %v779
        %v831 = vpop.permute.xlu0 %830
        %834 = vset.pattern.permute.xlu0 0
        %835 = vperm.xlu0 %834, %v780
        %v836 = vpop.permute.xlu0 %835
        %839 = vset.pattern.permute.xlu0 0
        %840 = vperm.xlu0 %839, %v781
        %v841 = vpop.permute.xlu0 %840
        %844 = vset.pattern.permute.xlu0 0
        %845 = vperm.xlu0 %844, %v782
        %v846 = vpop.permute.xlu0 %845
        %849 = vset.pattern.permute.xlu0 0
        %850 = vperm.xlu0 %849, %v783
        %v851 = vpop.permute.xlu0 %850
        %854 = vset.pattern.permute.xlu0 0
        %855 = vperm.xlu0 %854, %v784
        %v856 = vpop.permute.xlu0 %855
        %859 = vset.pattern.permute.xlu0 0
        %860 = vperm.xlu0 %859, %v785
        %v861 = vpop.permute.xlu0 %860
        %864 = vset.pattern.permute.xlu0 0
        %865 = vperm.xlu0 %864, %v786
        %v866 = vpop.permute.xlu0 %865
        %869 = vset.pattern.permute.xlu0 0
        %870 = vperm.xlu0 %869, %v787
        %v871 = vpop.permute.xlu0 %870
        %874 = vset.pattern.permute.xlu0 0
        %875 = vperm.xlu0 %874, %v788
        %v876 = vpop.permute.xlu0 %875
        %879 = vset.pattern.permute.xlu0 0
        %880 = vperm.xlu0 %879, %v789
        %v881 = vpop.permute.xlu0 %880
        %884 = vset.pattern.permute.xlu0 0
        %885 = vperm.xlu0 %884, %v790
        %v886 = vpop.permute.xlu0 %885
        %889 = vset.pattern.permute.xlu0 0
        %890 = vperm.xlu0 %889, %v791
        %v891 = vpop.permute.xlu0 %890
        %894 = vset.pattern.permute.xlu0 0
        %895 = vperm.xlu0 %894, %v792
        %v896 = vpop.permute.xlu0 %895
        %899 = vset.pattern.permute.xlu0 0
        %900 = vperm.xlu0 %899, %v793
        %v901 = vpop.permute.xlu0 %900
        %904 = vset.pattern.permute.xlu0 0
        %905 = vperm.xlu0 %904, %v794
        %v906 = vpop.permute.xlu0 %905
        %909 = vset.pattern.permute.xlu0 0
        %910 = vperm.xlu0 %909, %v795
        %v911 = vpop.permute.xlu0 %910
        %914 = vset.pattern.permute.xlu0 0
        %915 = vperm.xlu0 %914, %v796
        %v916 = vpop.permute.xlu0 %915
        %919 = vset.pattern.permute.xlu0 0
        %920 = vperm.xlu0 %919, %v797
        %v921 = vpop.permute.xlu0 %920
        %924 = vset.pattern.permute.xlu0 0
        %925 = vperm.xlu0 %924, %v798
        %v926 = vpop.permute.xlu0 %925
        %929 = vset.pattern.permute.xlu0 0
        %930 = vperm.xlu0 %929, %v799
        %v931 = vpop.permute.xlu0 %930
        %934 = vset.pattern.permute.xlu0 0
        %935 = vperm.xlu0 %934, %v800
        %v936 = vpop.permute.xlu0 %935
        %939 = vset.pattern.permute.xlu0 0
        %940 = vperm.xlu0 %939, %v801
        %v941 = vpop.permute.xlu0 %940
        %944 = vset.pattern.permute.xlu0 0
        %945 = vperm.xlu0 %944, %v802
        %v946 = vpop.permute.xlu0 %945
        %949 = vset.pattern.permute.xlu0 0
        %950 = vperm.xlu0 %949, %v803
        %v951 = vpop.permute.xlu0 %950
        %954 = vset.pattern.permute.xlu0 0
        %955 = vperm.xlu0 %954, %v804
        %v956 = vpop.permute.xlu0 %955
        %959 = vset.pattern.permute.xlu0 0
        %960 = vperm.xlu0 %959, %v805
        %v961 = vpop.permute.xlu0 %960
        %964 = vset.pattern.permute.xlu0 0
        %965 = vperm.xlu0 %964, %v806
        %v966 = vpop.permute.xlu0 %965
        %v969 = vperm.slane %v807, 0
        %v971 = vmul.f32 %v811, %v969
        %v972 = vmul.f32 %v816, %v969
        %v973 = vmul.f32 %v821, %v969
        %v974 = vmul.f32 %v826, %v969
        %v975 = vmul.f32 %v831, %v969
        %v976 = vmul.f32 %v836, %v969
        %v977 = vmul.f32 %v841, %v969
        %v978 = vmul.f32 %v846, %v969
        %v979 = vmul.f32 %v851, %v969
        %v980 = vmul.f32 %v856, %v969
        %v981 = vmul.f32 %v861, %v969
        %v982 = vmul.f32 %v866, %v969
        %v983 = vmul.f32 %v871, %v969
        %v984 = vmul.f32 %v876, %v969
        %v985 = vmul.f32 %v881, %v969
        %v986 = vmul.f32 %v886, %v969
        %v987 = vmul.f32 %v891, %v969
        %v988 = vmul.f32 %v896, %v969
        %v989 = vmul.f32 %v901, %v969
        %v990 = vmul.f32 %v906, %v969
        %v991 = vmul.f32 %v911, %v969
        %v992 = vmul.f32 %v916, %v969
        %v993 = vmul.f32 %v921, %v969
        %v994 = vmul.f32 %v926, %v969
        %v995 = vmul.f32 %v931, %v969
        %v996 = vmul.f32 %v936, %v969
        %v997 = vmul.f32 %v941, %v969
        %v998 = vmul.f32 %v946, %v969
        %v999 = vmul.f32 %v951, %v969
        %v1000 = vmul.f32 %v956, %v969
        %v1001 = vmul.f32 %v961, %v969
        %v1002 = vmul.f32 %v966, %v969
        %v1003 = vld [vmem:[%s5] sm:$0x1]
        %v1005 = vperm.slane %v1003, 0
        %v1007 = vadd.f32 %v971, %v1005
        %v1008 = vadd.f32 %v972, %v1005
        %v1009 = vadd.f32 %v973, %v1005
        %v1010 = vadd.f32 %v974, %v1005
        %v1011 = vadd.f32 %v975, %v1005
        %v1012 = vadd.f32 %v976, %v1005
        %v1013 = vadd.f32 %v977, %v1005
        %v1014 = vadd.f32 %v978, %v1005
        %v1015 = vadd.f32 %v979, %v1005
        %v1016 = vadd.f32 %v980, %v1005
        %v1017 = vadd.f32 %v981, %v1005
        %v1018 = vadd.f32 %v982, %v1005
        %v1019 = vadd.f32 %v983, %v1005
        %v1020 = vadd.f32 %v984, %v1005
        %v1021 = vadd.f32 %v985, %v1005
        %v1022 = vadd.f32 %v986, %v1005
        %v1023 = vadd.f32 %v987, %v1005
        %v1024 = vadd.f32 %v988, %v1005
        %v1025 = vadd.f32 %v989, %v1005
        %v1026 = vadd.f32 %v990, %v1005
        %v1027 = vadd.f32 %v991, %v1005
        %v1028 = vadd.f32 %v992, %v1005
        %v1029 = vadd.f32 %v993, %v1005
        %v1030 = vadd.f32 %v994, %v1005
        %v1031 = vadd.f32 %v995, %v1005
        %v1032 = vadd.f32 %v996, %v1005
        %v1033 = vadd.f32 %v997, %v1005
        %v1034 = vadd.f32 %v998, %v1005
        %v1035 = vadd.f32 %v999, %v1005
        %v1036 = vadd.f32 %v1000, %v1005
        %v1037 = vadd.f32 %v1001, %v1005
        %v1038 = vadd.f32 %v1002, %v1005
        %v1039 = vmax.f32 %v1007, 0.0
        %v1040 = vmax.f32 %v1008, 0.0
        %v1041 = vmax.f32 %v1009, 0.0
        %v1042 = vmax.f32 %v1010, 0.0
        %v1043 = vmax.f32 %v1011, 0.0
        %v1044 = vmax.f32 %v1012, 0.0
        %v1045 = vmax.f32 %v1013, 0.0
        %v1046 = vmax.f32 %v1014, 0.0
        %v1047 = vmax.f32 %v1015, 0.0
        %v1048 = vmax.f32 %v1016, 0.0
        %v1049 = vmax.f32 %v1017, 0.0
        %v1050 = vmax.f32 %v1018, 0.0
        %v1051 = vmax.f32 %v1019, 0.0
        %v1052 = vmax.f32 %v1020, 0.0
        %v1053 = vmax.f32 %v1021, 0.0
        %v1054 = vmax.f32 %v1022, 0.0
        %v1055 = vmax.f32 %v1023, 0.0
        %v1056 = vmax.f32 %v1024, 0.0
        %v1057 = vmax.f32 %v1025, 0.0
        %v1058 = vmax.f32 %v1026, 0.0
        %v1059 = vmax.f32 %v1027, 0.0
        %v1060 = vmax.f32 %v1028, 0.0
        %v1061 = vmax.f32 %v1029, 0.0
        %v1062 = vmax.f32 %v1030, 0.0
        %v1063 = vmax.f32 %v1031, 0.0
        %v1064 = vmax.f32 %v1032, 0.0
        %v1065 = vmax.f32 %v1033, 0.0
        %v1066 = vmax.f32 %v1034, 0.0
        %v1067 = vmax.f32 %v1035, 0.0
        %v1068 = vmax.f32 %v1036, 0.0
        %v1069 = vmax.f32 %v1037, 0.0
        %v1070 = vmax.f32 %v1038, 0.0
        %v1071 = vpack.c.bf16 %v1040, %v1039
        %v1072 = vpack.c.bf16 %v1042, %v1041
        %v1073 = vpack.c.bf16 %v1044, %v1043
        %v1074 = vpack.c.bf16 %v1046, %v1045
        %v1075 = vpack.c.bf16 %v1048, %v1047
        %v1076 = vpack.c.bf16 %v1050, %v1049
        %v1077 = vpack.c.bf16 %v1052, %v1051
        %v1078 = vpack.c.bf16 %v1054, %v1053
        %v1079 = vpack.c.bf16 %v1056, %v1055
        %v1080 = vpack.c.bf16 %v1058, %v1057
        %v1081 = vpack.c.bf16 %v1060, %v1059
        %v1082 = vpack.c.bf16 %v1062, %v1061
        %v1083 = vpack.c.bf16 %v1064, %v1063
        %v1084 = vpack.c.bf16 %v1066, %v1065
        %v1085 = vpack.c.bf16 %v1068, %v1067
        %v1086 = vpack.c.bf16 %v1070, %v1069
        %v1087 = vld [vmem:[%s6] sm:$0xf]
        %v1088 = vld [vmem:[%s6 + $0x10] sm:$0xf]
        %v1089 = vld [vmem:[%s6 + $0x20] sm:$0xf]
        %v1090 = vld [vmem:[%s6 + $0x30] sm:$0xf]
        %v1091 = vld [vmem:[%s6 + $0x40] sm:$0xf]
        %v1092 = vld [vmem:[%s6 + $0x50] sm:$0xf]
        %v1093 = vld [vmem:[%s6 + $0x60] sm:$0xf]
        %v1094 = vld [vmem:[%s6 + $0x70] sm:$0xf]
        %v1095 = vld [vmem:[%s6 + $0x80] sm:$0xf]
        %v1096 = vld [vmem:[%s6 + $0x90] sm:$0xf]
        %v1097 = vld [vmem:[%s6 + $0xa0] sm:$0xf]
        %v1098 = vld [vmem:[%s6 + $0xb0] sm:$0xf]
        %v1099 = vld [vmem:[%s6 + $0xc0] sm:$0xf]
        %v1100 = vld [vmem:[%s6 + $0xd0] sm:$0xf]
        %v1101 = vld [vmem:[%s6 + $0xe0] sm:$0xf]
        %v1102 = vld [vmem:[%s6 + $0xf0] sm:$0xf]
        %v1103 = vld [vmem:[%s7] sm:$0x1]
        %v1105 = vperm.slane %v1103, 0
        %v1123 = vunpack.c.l.b16 %v1087
        %v1124 = vunpack.c.l.b16 %v1088
        %v1125 = vunpack.c.l.b16 %v1089
        %v1126 = vunpack.c.l.b16 %v1090
        %v1127 = vunpack.c.l.b16 %v1091
        %v1128 = vunpack.c.l.b16 %v1092
        %v1129 = vunpack.c.l.b16 %v1093
        %v1130 = vunpack.c.l.b16 %v1094
        %v1131 = vunpack.c.l.b16 %v1095
        %v1132 = vunpack.c.l.b16 %v1096
        %v1133 = vunpack.c.l.b16 %v1097
        %v1134 = vunpack.c.l.b16 %v1098
        %v1135 = vunpack.c.l.b16 %v1099
        %v1136 = vunpack.c.l.b16 %v1100
        %v1137 = vunpack.c.l.b16 %v1101
        %v1138 = vunpack.c.l.b16 %v1102
        %v1139 = vpack.c.b16 %v1124, %v1123
        %v1140 = vpack.c.b16 %v1126, %v1125
        %v1141 = vpack.c.b16 %v1128, %v1127
        %v1142 = vpack.c.b16 %v1130, %v1129
        %v1143 = vpack.c.b16 %v1132, %v1131
        %v1144 = vpack.c.b16 %v1134, %v1133
        %v1145 = vpack.c.b16 %v1136, %v1135
        %v1146 = vpack.c.b16 %v1138, %v1137
        %1155 = vmatpush.bf16.msra.mxu0 %v1146
        %1156 = vmatpush.bf16.msra.mxu0 %v1145
        %1157 = vmatpush.bf16.msra.mxu0 %v1144
        %1158 = vmatpush.bf16.msra.mxu0 %v1143
        %1159 = vmatpush.bf16.msra.mxu0 %v1142
        %1160 = vmatpush.bf16.msra.mxu0 %v1141
        %1161 = vmatpush.bf16.msra.mxu0 %v1140
        %1162 = vmatpush.bf16.msra.mxu0 %v1139
        %1163 = vmatmul.bf16.gmra.mxu0 %v1071
        %v1164 = vpop.f32.mrf.mxu0
        %v1165 = vadd.f32 %v1105, %v1164
        %v1166 = vpop.f32.mrf.mxu0
        %v1167 = vadd.f32 %v1105, %v1166
        %1168 = vmatmul.bf16.gmra.mxu0 %v1072
        %v1169 = vpop.f32.mrf.mxu0
        %v1170 = vadd.f32 %v1105, %v1169
        %v1171 = vpop.f32.mrf.mxu0
        %v1172 = vadd.f32 %v1105, %v1171
        %1173 = vmatmul.bf16.gmra.mxu0 %v1073
        %v1174 = vpop.f32.mrf.mxu0
        %v1175 = vadd.f32 %v1105, %v1174
        %v1176 = vpop.f32.mrf.mxu0
        %v1177 = vadd.f32 %v1105, %v1176
        %1178 = vmatmul.bf16.gmra.mxu0 %v1074
        %v1179 = vpop.f32.mrf.mxu0
        %v1180 = vadd.f32 %v1105, %v1179
        %v1181 = vpop.f32.mrf.mxu0
        %v1182 = vadd.f32 %v1105, %v1181
        %1183 = vmatmul.bf16.gmra.mxu0 %v1075
        %v1184 = vpop.f32.mrf.mxu0
        %v1185 = vadd.f32 %v1105, %v1184
        %v1186 = vpop.f32.mrf.mxu0
        %v1187 = vadd.f32 %v1105, %v1186
        %1188 = vmatmul.bf16.gmra.mxu0 %v1076
        %v1189 = vpop.f32.mrf.mxu0
        %v1190 = vadd.f32 %v1105, %v1189
        %v1191 = vpop.f32.mrf.mxu0
        %v1192 = vadd.f32 %v1105, %v1191
        %1193 = vmatmul.bf16.gmra.mxu0 %v1077
        %v1194 = vpop.f32.mrf.mxu0
        %v1195 = vadd.f32 %v1105, %v1194
        %v1196 = vpop.f32.mrf.mxu0
        %v1197 = vadd.f32 %v1105, %v1196
        %1198 = vmatmul.bf16.gmra.mxu0 %v1078
        %v1199 = vpop.f32.mrf.mxu0
        %v1200 = vadd.f32 %v1105, %v1199
        %v1201 = vpop.f32.mrf.mxu0
        %v1202 = vadd.f32 %v1105, %v1201
        %1203 = vmatmul.bf16.gmra.mxu0 %v1079
        %v1204 = vpop.f32.mrf.mxu0
        %v1205 = vadd.f32 %v1105, %v1204
        %v1206 = vpop.f32.mrf.mxu0
        %v1207 = vadd.f32 %v1105, %v1206
        %1208 = vmatmul.bf16.gmra.mxu0 %v1080
        %v1209 = vpop.f32.mrf.mxu0
        %v1210 = vadd.f32 %v1105, %v1209
        %v1211 = vpop.f32.mrf.mxu0
        %v1212 = vadd.f32 %v1105, %v1211
        %1213 = vmatmul.bf16.gmra.mxu0 %v1081
        %v1214 = vpop.f32.mrf.mxu0
        %v1215 = vadd.f32 %v1105, %v1214
        %v1216 = vpop.f32.mrf.mxu0
        %v1217 = vadd.f32 %v1105, %v1216
        %1218 = vmatmul.bf16.gmra.mxu0 %v1082
        %v1219 = vpop.f32.mrf.mxu0
        %v1220 = vadd.f32 %v1105, %v1219
        %v1221 = vpop.f32.mrf.mxu0
        %v1222 = vadd.f32 %v1105, %v1221
        %1223 = vmatmul.bf16.gmra.mxu0 %v1083
        %v1224 = vpop.f32.mrf.mxu0
        %v1225 = vadd.f32 %v1105, %v1224
        %v1226 = vpop.f32.mrf.mxu0
        %v1227 = vadd.f32 %v1105, %v1226
        %1228 = vmatmul.bf16.gmra.mxu0 %v1084
        %v1229 = vpop.f32.mrf.mxu0
        %v1230 = vadd.f32 %v1105, %v1229
        %v1231 = vpop.f32.mrf.mxu0
        %v1232 = vadd.f32 %v1105, %v1231
        %1233 = vmatmul.bf16.gmra.mxu0 %v1085
        %v1234 = vpop.f32.mrf.mxu0
        %v1235 = vadd.f32 %v1105, %v1234
        %v1236 = vpop.f32.mrf.mxu0
        %v1237 = vadd.f32 %v1105, %v1236
        %1238 = vmatmul.bf16.gmra.mxu0 %v1086
        %v1239 = vpop.f32.mrf.mxu0
        %v1240 = vadd.f32 %v1105, %v1239
        %v1241 = vpop.f32.mrf.mxu0
        %v1242 = vadd.f32 %v1105, %v1241
        %1243 = vdwg.mxu0
        %1245 = vset.pattern.permute.xlu0 0
        %1246 = vperm.xlu0 %1245, %v696
        %v1247 = vpop.permute.xlu0 %1246
        %1250 = vset.pattern.permute.xlu0 0
        %1251 = vperm.xlu0 %1250, %v698
        %v1252 = vpop.permute.xlu0 %1251
        %1255 = vset.pattern.permute.xlu0 0
        %1256 = vperm.xlu0 %1255, %v701
        %v1257 = vpop.permute.xlu0 %1256
        %1260 = vset.pattern.permute.xlu0 0
        %1261 = vperm.xlu0 %1260, %v703
        %v1262 = vpop.permute.xlu0 %1261
        %1265 = vset.pattern.permute.xlu0 0
        %1266 = vperm.xlu0 %1265, %v706
        %v1267 = vpop.permute.xlu0 %1266
        %1270 = vset.pattern.permute.xlu0 0
        %1271 = vperm.xlu0 %1270, %v708
        %v1272 = vpop.permute.xlu0 %1271
        %1275 = vset.pattern.permute.xlu0 0
        %1276 = vperm.xlu0 %1275, %v711
        %v1277 = vpop.permute.xlu0 %1276
        %1280 = vset.pattern.permute.xlu0 0
        %1281 = vperm.xlu0 %1280, %v713
        %v1282 = vpop.permute.xlu0 %1281
        %1285 = vset.pattern.permute.xlu0 0
        %1286 = vperm.xlu0 %1285, %v716
        %v1287 = vpop.permute.xlu0 %1286
        %1290 = vset.pattern.permute.xlu0 0
        %1291 = vperm.xlu0 %1290, %v718
        %v1292 = vpop.permute.xlu0 %1291
        %1295 = vset.pattern.permute.xlu0 0
        %1296 = vperm.xlu0 %1295, %v721
        %v1297 = vpop.permute.xlu0 %1296
        %1300 = vset.pattern.permute.xlu0 0
        %1301 = vperm.xlu0 %1300, %v723
        %v1302 = vpop.permute.xlu0 %1301
        %1305 = vset.pattern.permute.xlu0 0
        %1306 = vperm.xlu0 %1305, %v726
        %v1307 = vpop.permute.xlu0 %1306
        %1310 = vset.pattern.permute.xlu0 0
        %1311 = vperm.xlu0 %1310, %v728
        %v1312 = vpop.permute.xlu0 %1311
        %1315 = vset.pattern.permute.xlu0 0
        %1316 = vperm.xlu0 %1315, %v731
        %v1317 = vpop.permute.xlu0 %1316
        %1320 = vset.pattern.permute.xlu0 0
        %1321 = vperm.xlu0 %1320, %v733
        %v1322 = vpop.permute.xlu0 %1321
        %1325 = vset.pattern.permute.xlu0 0
        %1326 = vperm.xlu0 %1325, %v736
        %v1327 = vpop.permute.xlu0 %1326
        %1330 = vset.pattern.permute.xlu0 0
        %1331 = vperm.xlu0 %1330, %v738
        %v1332 = vpop.permute.xlu0 %1331
        %1335 = vset.pattern.permute.xlu0 0
        %1336 = vperm.xlu0 %1335, %v741
        %v1337 = vpop.permute.xlu0 %1336
        %1340 = vset.pattern.permute.xlu0 0
        %1341 = vperm.xlu0 %1340, %v743
        %v1342 = vpop.permute.xlu0 %1341
        %1345 = vset.pattern.permute.xlu0 0
        %1346 = vperm.xlu0 %1345, %v746
        %v1347 = vpop.permute.xlu0 %1346
        %1350 = vset.pattern.permute.xlu0 0
        %1351 = vperm.xlu0 %1350, %v748
        %v1352 = vpop.permute.xlu0 %1351
        %1355 = vset.pattern.permute.xlu0 0
        %1356 = vperm.xlu0 %1355, %v751
        %v1357 = vpop.permute.xlu0 %1356
        %1360 = vset.pattern.permute.xlu0 0
        %1361 = vperm.xlu0 %1360, %v753
        %v1362 = vpop.permute.xlu0 %1361
        %1365 = vset.pattern.permute.xlu0 0
        %1366 = vperm.xlu0 %1365, %v756
        %v1367 = vpop.permute.xlu0 %1366
        %1370 = vset.pattern.permute.xlu0 0
        %1371 = vperm.xlu0 %1370, %v758
        %v1372 = vpop.permute.xlu0 %1371
        %1375 = vset.pattern.permute.xlu0 0
        %1376 = vperm.xlu0 %1375, %v761
        %v1377 = vpop.permute.xlu0 %1376
        %1380 = vset.pattern.permute.xlu0 0
        %1381 = vperm.xlu0 %1380, %v763
        %v1382 = vpop.permute.xlu0 %1381
        %1385 = vset.pattern.permute.xlu0 0
        %1386 = vperm.xlu0 %1385, %v766
        %v1387 = vpop.permute.xlu0 %1386
        %1390 = vset.pattern.permute.xlu0 0
        %1391 = vperm.xlu0 %1390, %v768
        %v1392 = vpop.permute.xlu0 %1391
        %1395 = vset.pattern.permute.xlu0 0
        %1396 = vperm.xlu0 %1395, %v771
        %v1397 = vpop.permute.xlu0 %1396
        %1400 = vset.pattern.permute.xlu0 0
        %1401 = vperm.xlu0 %1400, %v773
        %v1402 = vpop.permute.xlu0 %1401
        %v1404 = vmul.f32 %v1247, %v1165
        %v1405 = vmul.f32 %v1252, %v1167
        %v1406 = vmul.f32 %v1257, %v1170
        %v1407 = vmul.f32 %v1262, %v1172
        %v1408 = vmul.f32 %v1267, %v1175
        %v1409 = vmul.f32 %v1272, %v1177
        %v1410 = vmul.f32 %v1277, %v1180
        %v1411 = vmul.f32 %v1282, %v1182
        %v1412 = vmul.f32 %v1287, %v1185
        %v1413 = vmul.f32 %v1292, %v1187
        %v1414 = vmul.f32 %v1297, %v1190
        %v1415 = vmul.f32 %v1302, %v1192
        %v1416 = vmul.f32 %v1307, %v1195
        %v1417 = vmul.f32 %v1312, %v1197
        %v1418 = vmul.f32 %v1317, %v1200
        %v1419 = vmul.f32 %v1322, %v1202
        %v1420 = vmul.f32 %v1327, %v1205
        %v1421 = vmul.f32 %v1332, %v1207
        %v1422 = vmul.f32 %v1337, %v1210
        %v1423 = vmul.f32 %v1342, %v1212
        %v1424 = vmul.f32 %v1347, %v1215
        %v1425 = vmul.f32 %v1352, %v1217
        %v1426 = vmul.f32 %v1357, %v1220
        %v1427 = vmul.f32 %v1362, %v1222
        %v1428 = vmul.f32 %v1367, %v1225
        %v1429 = vmul.f32 %v1372, %v1227
        %v1430 = vmul.f32 %v1377, %v1230
        %v1431 = vmul.f32 %v1382, %v1232
        %v1432 = vmul.f32 %v1387, %v1235
        %v1433 = vmul.f32 %v1392, %v1237
        %v1434 = vmul.f32 %v1397, %v1240
        %v1435 = vmul.f32 %v1402, %v1242
        %v1436 = vadd.f32 %v1404, 0.0
        %v1437 = vadd.f32 %v1405, 0.0
        %v1438 = vadd.f32 %v1406, 0.0
        %v1439 = vadd.f32 %v1407, 0.0
        %v1440 = vadd.f32 %v1408, 0.0
        %v1441 = vadd.f32 %v1409, 0.0
        %v1442 = vadd.f32 %v1410, 0.0
        %v1443 = vadd.f32 %v1411, 0.0
        %v1444 = vadd.f32 %v1412, 0.0
        %v1445 = vadd.f32 %v1413, 0.0
        %v1446 = vadd.f32 %v1414, 0.0
        %v1447 = vadd.f32 %v1415, 0.0
        %v1448 = vadd.f32 %v1416, 0.0
        %v1449 = vadd.f32 %v1417, 0.0
        %v1450 = vadd.f32 %v1418, 0.0
        %v1451 = vadd.f32 %v1419, 0.0
        %v1452 = vadd.f32 %v1420, 0.0
        %v1453 = vadd.f32 %v1421, 0.0
        %v1454 = vadd.f32 %v1422, 0.0
        %v1455 = vadd.f32 %v1423, 0.0
        %v1456 = vadd.f32 %v1424, 0.0
        %v1457 = vadd.f32 %v1425, 0.0
        %v1458 = vadd.f32 %v1426, 0.0
        %v1459 = vadd.f32 %v1427, 0.0
        %v1460 = vadd.f32 %v1428, 0.0
        %v1461 = vadd.f32 %v1429, 0.0
        %v1462 = vadd.f32 %v1430, 0.0
        %v1463 = vadd.f32 %v1431, 0.0
        %v1464 = vadd.f32 %v1432, 0.0
        %v1465 = vadd.f32 %v1433, 0.0
        %v1466 = vadd.f32 %v1434, 0.0
        %v1467 = vadd.f32 %v1435, 0.0
        %v1468 = vld [vmem:[%s6 + $0x4] sm:$0xf]
        %v1469 = vld [vmem:[%s6 + $0x14] sm:$0xf]
        %v1470 = vld [vmem:[%s6 + $0x24] sm:$0xf]
        %v1471 = vld [vmem:[%s6 + $0x34] sm:$0xf]
        %v1472 = vld [vmem:[%s6 + $0x44] sm:$0xf]
        %v1473 = vld [vmem:[%s6 + $0x54] sm:$0xf]
        %v1474 = vld [vmem:[%s6 + $0x64] sm:$0xf]
        %v1475 = vld [vmem:[%s6 + $0x74] sm:$0xf]
        %v1476 = vld [vmem:[%s6 + $0x84] sm:$0xf]
        %v1477 = vld [vmem:[%s6 + $0x94] sm:$0xf]
        %v1478 = vld [vmem:[%s6 + $0xa4] sm:$0xf]
        %v1479 = vld [vmem:[%s6 + $0xb4] sm:$0xf]
        %v1480 = vld [vmem:[%s6 + $0xc4] sm:$0xf]
        %v1481 = vld [vmem:[%s6 + $0xd4] sm:$0xf]
        %v1482 = vld [vmem:[%s6 + $0xe4] sm:$0xf]
        %v1483 = vld [vmem:[%s6 + $0xf4] sm:$0xf]
        %v1484 = vld [vmem:[%s7 + $0x1] sm:$0x1]
        %v1486 = vperm.slane %v1484, 0
        %v1504 = vunpack.c.l.b16 %v1468
        %v1505 = vunpack.c.l.b16 %v1469
        %v1506 = vunpack.c.l.b16 %v1470
        %v1507 = vunpack.c.l.b16 %v1471
        %v1508 = vunpack.c.l.b16 %v1472
        %v1509 = vunpack.c.l.b16 %v1473
        %v1510 = vunpack.c.l.b16 %v1474
        %v1511 = vunpack.c.l.b16 %v1475
        %v1512 = vunpack.c.l.b16 %v1476
        %v1513 = vunpack.c.l.b16 %v1477
        %v1514 = vunpack.c.l.b16 %v1478
        %v1515 = vunpack.c.l.b16 %v1479
        %v1516 = vunpack.c.l.b16 %v1480
        %v1517 = vunpack.c.l.b16 %v1481
        %v1518 = vunpack.c.l.b16 %v1482
        %v1519 = vunpack.c.l.b16 %v1483
        %v1520 = vpack.c.b16 %v1505, %v1504
        %v1521 = vpack.c.b16 %v1507, %v1506
        %v1522 = vpack.c.b16 %v1509, %v1508
        %v1523 = vpack.c.b16 %v1511, %v1510
        %v1524 = vpack.c.b16 %v1513, %v1512
        %v1525 = vpack.c.b16 %v1515, %v1514
        %v1526 = vpack.c.b16 %v1517, %v1516
        %v1527 = vpack.c.b16 %v1519, %v1518
        %1536 = vmatpush.bf16.msra.mxu0 %v1527
        %1537 = vmatpush.bf16.msra.mxu0 %v1526
        %1538 = vmatpush.bf16.msra.mxu0 %v1525
        %1539 = vmatpush.bf16.msra.mxu0 %v1524
        %1540 = vmatpush.bf16.msra.mxu0 %v1523
        %1541 = vmatpush.bf16.msra.mxu0 %v1522
        %1542 = vmatpush.bf16.msra.mxu0 %v1521
        %1543 = vmatpush.bf16.msra.mxu0 %v1520
        %1544 = vmatmul.bf16.gmra.mxu0 %v1071
        %v1545 = vpop.f32.mrf.mxu0
        %v1546 = vadd.f32 %v1486, %v1545
        %v1547 = vpop.f32.mrf.mxu0
        %v1548 = vadd.f32 %v1486, %v1547
        %1549 = vmatmul.bf16.gmra.mxu0 %v1072
        %v1550 = vpop.f32.mrf.mxu0
        %v1551 = vadd.f32 %v1486, %v1550
        %v1552 = vpop.f32.mrf.mxu0
        %v1553 = vadd.f32 %v1486, %v1552
        %1554 = vmatmul.bf16.gmra.mxu0 %v1073
        %v1555 = vpop.f32.mrf.mxu0
        %v1556 = vadd.f32 %v1486, %v1555
        %v1557 = vpop.f32.mrf.mxu0
        %v1558 = vadd.f32 %v1486, %v1557
        %1559 = vmatmul.bf16.gmra.mxu0 %v1074
        %v1560 = vpop.f32.mrf.mxu0
        %v1561 = vadd.f32 %v1486, %v1560
        %v1562 = vpop.f32.mrf.mxu0
        %v1563 = vadd.f32 %v1486, %v1562
        %1564 = vmatmul.bf16.gmra.mxu0 %v1075
        %v1565 = vpop.f32.mrf.mxu0
        %v1566 = vadd.f32 %v1486, %v1565
        %v1567 = vpop.f32.mrf.mxu0
        %v1568 = vadd.f32 %v1486, %v1567
        %1569 = vmatmul.bf16.gmra.mxu0 %v1076
        %v1570 = vpop.f32.mrf.mxu0
        %v1571 = vadd.f32 %v1486, %v1570
        %v1572 = vpop.f32.mrf.mxu0
        %v1573 = vadd.f32 %v1486, %v1572
        %1574 = vmatmul.bf16.gmra.mxu0 %v1077
        %v1575 = vpop.f32.mrf.mxu0
        %v1576 = vadd.f32 %v1486, %v1575
        %v1577 = vpop.f32.mrf.mxu0
        %v1578 = vadd.f32 %v1486, %v1577
        %1579 = vmatmul.bf16.gmra.mxu0 %v1078
        %v1580 = vpop.f32.mrf.mxu0
        %v1581 = vadd.f32 %v1486, %v1580
        %v1582 = vpop.f32.mrf.mxu0
        %v1583 = vadd.f32 %v1486, %v1582
        %1584 = vmatmul.bf16.gmra.mxu0 %v1079
        %v1585 = vpop.f32.mrf.mxu0
        %v1586 = vadd.f32 %v1486, %v1585
        %v1587 = vpop.f32.mrf.mxu0
        %v1588 = vadd.f32 %v1486, %v1587
        %1589 = vmatmul.bf16.gmra.mxu0 %v1080
        %v1590 = vpop.f32.mrf.mxu0
        %v1591 = vadd.f32 %v1486, %v1590
        %v1592 = vpop.f32.mrf.mxu0
        %v1593 = vadd.f32 %v1486, %v1592
        %1594 = vmatmul.bf16.gmra.mxu0 %v1081
        %v1595 = vpop.f32.mrf.mxu0
        %v1596 = vadd.f32 %v1486, %v1595
        %v1597 = vpop.f32.mrf.mxu0
        %v1598 = vadd.f32 %v1486, %v1597
        %1599 = vmatmul.bf16.gmra.mxu0 %v1082
        %v1600 = vpop.f32.mrf.mxu0
        %v1601 = vadd.f32 %v1486, %v1600
        %v1602 = vpop.f32.mrf.mxu0
        %v1603 = vadd.f32 %v1486, %v1602
        %1604 = vmatmul.bf16.gmra.mxu0 %v1083
        %v1605 = vpop.f32.mrf.mxu0
        %v1606 = vadd.f32 %v1486, %v1605
        %v1607 = vpop.f32.mrf.mxu0
        %v1608 = vadd.f32 %v1486, %v1607
        %1609 = vmatmul.bf16.gmra.mxu0 %v1084
        %v1610 = vpop.f32.mrf.mxu0
        %v1611 = vadd.f32 %v1486, %v1610
        %v1612 = vpop.f32.mrf.mxu0
        %v1613 = vadd.f32 %v1486, %v1612
        %1614 = vmatmul.bf16.gmra.mxu0 %v1085
        %v1615 = vpop.f32.mrf.mxu0
        %v1616 = vadd.f32 %v1486, %v1615
        %v1617 = vpop.f32.mrf.mxu0
        %v1618 = vadd.f32 %v1486, %v1617
        %1619 = vmatmul.bf16.gmra.mxu0 %v1086
        %v1620 = vpop.f32.mrf.mxu0
        %v1621 = vadd.f32 %v1486, %v1620
        %v1622 = vpop.f32.mrf.mxu0
        %v1623 = vadd.f32 %v1486, %v1622
        %1624 = vdwg.mxu0
        %1625 = vset.pattern.permute.xlu0 1
        %1626 = vperm.xlu0 %1625, %v696
        %v1627 = vpop.permute.xlu0 %1626
        %1629 = vset.pattern.permute.xlu0 1
        %1630 = vperm.xlu0 %1629, %v698
        %v1631 = vpop.permute.xlu0 %1630
        %1633 = vset.pattern.permute.xlu0 1
        %1634 = vperm.xlu0 %1633, %v701
        %v1635 = vpop.permute.xlu0 %1634
        %1637 = vset.pattern.permute.xlu0 1
        %1638 = vperm.xlu0 %1637, %v703
        %v1639 = vpop.permute.xlu0 %1638
        %1641 = vset.pattern.permute.xlu0 1
        %1642 = vperm.xlu0 %1641, %v706
        %v1643 = vpop.permute.xlu0 %1642
        %1645 = vset.pattern.permute.xlu0 1
        %1646 = vperm.xlu0 %1645, %v708
        %v1647 = vpop.permute.xlu0 %1646
        %1649 = vset.pattern.permute.xlu0 1
        %1650 = vperm.xlu0 %1649, %v711
        %v1651 = vpop.permute.xlu0 %1650
        %1653 = vset.pattern.permute.xlu0 1
        %1654 = vperm.xlu0 %1653, %v713
        %v1655 = vpop.permute.xlu0 %1654
        %1657 = vset.pattern.permute.xlu0 1
        %1658 = vperm.xlu0 %1657, %v716
        %v1659 = vpop.permute.xlu0 %1658
        %1661 = vset.pattern.permute.xlu0 1
        %1662 = vperm.xlu0 %1661, %v718
        %v1663 = vpop.permute.xlu0 %1662
        %1665 = vset.pattern.permute.xlu0 1
        %1666 = vperm.xlu0 %1665, %v721
        %v1667 = vpop.permute.xlu0 %1666
        %1669 = vset.pattern.permute.xlu0 1
        %1670 = vperm.xlu0 %1669, %v723
        %v1671 = vpop.permute.xlu0 %1670
        %1673 = vset.pattern.permute.xlu0 1
        %1674 = vperm.xlu0 %1673, %v726
        %v1675 = vpop.permute.xlu0 %1674
        %1677 = vset.pattern.permute.xlu0 1
        %1678 = vperm.xlu0 %1677, %v728
        %v1679 = vpop.permute.xlu0 %1678
        %1681 = vset.pattern.permute.xlu0 1
        %1682 = vperm.xlu0 %1681, %v731
        %v1683 = vpop.permute.xlu0 %1682
        %1685 = vset.pattern.permute.xlu0 1
        %1686 = vperm.xlu0 %1685, %v733
        %v1687 = vpop.permute.xlu0 %1686
        %1689 = vset.pattern.permute.xlu0 1
        %1690 = vperm.xlu0 %1689, %v736
        %v1691 = vpop.permute.xlu0 %1690
        %1693 = vset.pattern.permute.xlu0 1
        %1694 = vperm.xlu0 %1693, %v738
        %v1695 = vpop.permute.xlu0 %1694
        %1697 = vset.pattern.permute.xlu0 1
        %1698 = vperm.xlu0 %1697, %v741
        %v1699 = vpop.permute.xlu0 %1698
        %1701 = vset.pattern.permute.xlu0 1
        %1702 = vperm.xlu0 %1701, %v743
        %v1703 = vpop.permute.xlu0 %1702
        %1705 = vset.pattern.permute.xlu0 1
        %1706 = vperm.xlu0 %1705, %v746
        %v1707 = vpop.permute.xlu0 %1706
        %1709 = vset.pattern.permute.xlu0 1
        %1710 = vperm.xlu0 %1709, %v748
        %v1711 = vpop.permute.xlu0 %1710
        %1713 = vset.pattern.permute.xlu0 1
        %1714 = vperm.xlu0 %1713, %v751
        %v1715 = vpop.permute.xlu0 %1714
        %1717 = vset.pattern.permute.xlu0 1
        %1718 = vperm.xlu0 %1717, %v753
        %v1719 = vpop.permute.xlu0 %1718
        %1721 = vset.pattern.permute.xlu0 1
        %1722 = vperm.xlu0 %1721, %v756
        %v1723 = vpop.permute.xlu0 %1722
        %1725 = vset.pattern.permute.xlu0 1
        %1726 = vperm.xlu0 %1725, %v758
        %v1727 = vpop.permute.xlu0 %1726
        %1729 = vset.pattern.permute.xlu0 1
        %1730 = vperm.xlu0 %1729, %v761
        %v1731 = vpop.permute.xlu0 %1730
        %1733 = vset.pattern.permute.xlu0 1
        %1734 = vperm.xlu0 %1733, %v763
        %v1735 = vpop.permute.xlu0 %1734
        %1737 = vset.pattern.permute.xlu0 1
        %1738 = vperm.xlu0 %1737, %v766
        %v1739 = vpop.permute.xlu0 %1738
        %1741 = vset.pattern.permute.xlu0 1
        %1742 = vperm.xlu0 %1741, %v768
        %v1743 = vpop.permute.xlu0 %1742
        %1745 = vset.pattern.permute.xlu0 1
        %1746 = vperm.xlu0 %1745, %v771
        %v1747 = vpop.permute.xlu0 %1746
        %1749 = vset.pattern.permute.xlu0 1
        %1750 = vperm.xlu0 %1749, %v773
        %v1751 = vpop.permute.xlu0 %1750
        %v1753 = vmul.f32 %v1627, %v1546
        %v1754 = vmul.f32 %v1631, %v1548
        %v1755 = vmul.f32 %v1635, %v1551
        %v1756 = vmul.f32 %v1639, %v1553
        %v1757 = vmul.f32 %v1643, %v1556
        %v1758 = vmul.f32 %v1647, %v1558
        %v1759 = vmul.f32 %v1651, %v1561
        %v1760 = vmul.f32 %v1655, %v1563
        %v1761 = vmul.f32 %v1659, %v1566
        %v1762 = vmul.f32 %v1663, %v1568
        %v1763 = vmul.f32 %v1667, %v1571
        %v1764 = vmul.f32 %v1671, %v1573
        %v1765 = vmul.f32 %v1675, %v1576
        %v1766 = vmul.f32 %v1679, %v1578
        %v1767 = vmul.f32 %v1683, %v1581
        %v1768 = vmul.f32 %v1687, %v1583
        %v1769 = vmul.f32 %v1691, %v1586
        %v1770 = vmul.f32 %v1695, %v1588
        %v1771 = vmul.f32 %v1699, %v1591
        %v1772 = vmul.f32 %v1703, %v1593
        %v1773 = vmul.f32 %v1707, %v1596
        %v1774 = vmul.f32 %v1711, %v1598
        %v1775 = vmul.f32 %v1715, %v1601
        %v1776 = vmul.f32 %v1719, %v1603
        %v1777 = vmul.f32 %v1723, %v1606
        %v1778 = vmul.f32 %v1727, %v1608
        %v1779 = vmul.f32 %v1731, %v1611
        %v1780 = vmul.f32 %v1735, %v1613
        %v1781 = vmul.f32 %v1739, %v1616
        %v1782 = vmul.f32 %v1743, %v1618
        %v1783 = vmul.f32 %v1747, %v1621
        %v1784 = vmul.f32 %v1751, %v1623
        %v1785 = vadd.f32 %v1436, %v1753
        %v1786 = vadd.f32 %v1437, %v1754
        %v1787 = vadd.f32 %v1438, %v1755
        %v1788 = vadd.f32 %v1439, %v1756
        %v1789 = vadd.f32 %v1440, %v1757
        %v1790 = vadd.f32 %v1441, %v1758
        %v1791 = vadd.f32 %v1442, %v1759
        %v1792 = vadd.f32 %v1443, %v1760
        %v1793 = vadd.f32 %v1444, %v1761
        %v1794 = vadd.f32 %v1445, %v1762
        %v1795 = vadd.f32 %v1446, %v1763
        %v1796 = vadd.f32 %v1447, %v1764
        %v1797 = vadd.f32 %v1448, %v1765
        %v1798 = vadd.f32 %v1449, %v1766
        %v1799 = vadd.f32 %v1450, %v1767
        %v1800 = vadd.f32 %v1451, %v1768
        %v1801 = vadd.f32 %v1452, %v1769
        %v1802 = vadd.f32 %v1453, %v1770
        %v1803 = vadd.f32 %v1454, %v1771
        %v1804 = vadd.f32 %v1455, %v1772
        %v1805 = vadd.f32 %v1456, %v1773
        %v1806 = vadd.f32 %v1457, %v1774
        %v1807 = vadd.f32 %v1458, %v1775
        %v1808 = vadd.f32 %v1459, %v1776
        %v1809 = vadd.f32 %v1460, %v1777
        %v1810 = vadd.f32 %v1461, %v1778
        %v1811 = vadd.f32 %v1462, %v1779
        %v1812 = vadd.f32 %v1463, %v1780
        %v1813 = vadd.f32 %v1464, %v1781
        %v1814 = vadd.f32 %v1465, %v1782
        %v1815 = vadd.f32 %v1466, %v1783
        %v1816 = vadd.f32 %v1467, %v1784
        %v1817 = vld [vmem:[%s6 + $0x8] sm:$0xf]
        %v1818 = vld [vmem:[%s6 + $0x18] sm:$0xf]
        %v1819 = vld [vmem:[%s6 + $0x28] sm:$0xf]
        %v1820 = vld [vmem:[%s6 + $0x38] sm:$0xf]
        %v1821 = vld [vmem:[%s6 + $0x48] sm:$0xf]
        %v1822 = vld [vmem:[%s6 + $0x58] sm:$0xf]
        %v1823 = vld [vmem:[%s6 + $0x68] sm:$0xf]
        %v1824 = vld [vmem:[%s6 + $0x78] sm:$0xf]
        %v1825 = vld [vmem:[%s6 + $0x88] sm:$0xf]
        %v1826 = vld [vmem:[%s6 + $0x98] sm:$0xf]
        %v1827 = vld [vmem:[%s6 + $0xa8] sm:$0xf]
        %v1828 = vld [vmem:[%s6 + $0xb8] sm:$0xf]
        %v1829 = vld [vmem:[%s6 + $0xc8] sm:$0xf]
        %v1830 = vld [vmem:[%s6 + $0xd8] sm:$0xf]
        %v1831 = vld [vmem:[%s6 + $0xe8] sm:$0xf]
        %v1832 = vld [vmem:[%s6 + $0xf8] sm:$0xf]
        %v1833 = vld [vmem:[%s7 + $0x2] sm:$0x1]
        %v1835 = vperm.slane %v1833, 0
        %v1853 = vunpack.c.l.b16 %v1817
        %v1854 = vunpack.c.l.b16 %v1818
        %v1855 = vunpack.c.l.b16 %v1819
        %v1856 = vunpack.c.l.b16 %v1820
        %v1857 = vunpack.c.l.b16 %v1821
        %v1858 = vunpack.c.l.b16 %v1822
        %v1859 = vunpack.c.l.b16 %v1823
        %v1860 = vunpack.c.l.b16 %v1824
        %v1861 = vunpack.c.l.b16 %v1825
        %v1862 = vunpack.c.l.b16 %v1826
        %v1863 = vunpack.c.l.b16 %v1827
        %v1864 = vunpack.c.l.b16 %v1828
        %v1865 = vunpack.c.l.b16 %v1829
        %v1866 = vunpack.c.l.b16 %v1830
        %v1867 = vunpack.c.l.b16 %v1831
        %v1868 = vunpack.c.l.b16 %v1832
        %v1869 = vpack.c.b16 %v1854, %v1853
        %v1870 = vpack.c.b16 %v1856, %v1855
        %v1871 = vpack.c.b16 %v1858, %v1857
        %v1872 = vpack.c.b16 %v1860, %v1859
        %v1873 = vpack.c.b16 %v1862, %v1861
        %v1874 = vpack.c.b16 %v1864, %v1863
        %v1875 = vpack.c.b16 %v1866, %v1865
        %v1876 = vpack.c.b16 %v1868, %v1867
        %1885 = vmatpush.bf16.msra.mxu0 %v1876
        %1886 = vmatpush.bf16.msra.mxu0 %v1875
        %1887 = vmatpush.bf16.msra.mxu0 %v1874
        %1888 = vmatpush.bf16.msra.mxu0 %v1873
        %1889 = vmatpush.bf16.msra.mxu0 %v1872
        %1890 = vmatpush.bf16.msra.mxu0 %v1871
        %1891 = vmatpush.bf16.msra.mxu0 %v1870
        %1892 = vmatpush.bf16.msra.mxu0 %v1869
        %1893 = vmatmul.bf16.gmra.mxu0 %v1071
        %v1894 = vpop.f32.mrf.mxu0
        %v1895 = vadd.f32 %v1835, %v1894
        %v1896 = vpop.f32.mrf.mxu0
        %v1897 = vadd.f32 %v1835, %v1896
        %1898 = vmatmul.bf16.gmra.mxu0 %v1072
        %v1899 = vpop.f32.mrf.mxu0
        %v1900 = vadd.f32 %v1835, %v1899
        %v1901 = vpop.f32.mrf.mxu0
        %v1902 = vadd.f32 %v1835, %v1901
        %1903 = vmatmul.bf16.gmra.mxu0 %v1073
        %v1904 = vpop.f32.mrf.mxu0
        %v1905 = vadd.f32 %v1835, %v1904
        %v1906 = vpop.f32.mrf.mxu0
        %v1907 = vadd.f32 %v1835, %v1906
        %1908 = vmatmul.bf16.gmra.mxu0 %v1074
        %v1909 = vpop.f32.mrf.mxu0
        %v1910 = vadd.f32 %v1835, %v1909
        %v1911 = vpop.f32.mrf.mxu0
        %v1912 = vadd.f32 %v1835, %v1911
        %1913 = vmatmul.bf16.gmra.mxu0 %v1075
        %v1914 = vpop.f32.mrf.mxu0
        %v1915 = vadd.f32 %v1835, %v1914
        %v1916 = vpop.f32.mrf.mxu0
        %v1917 = vadd.f32 %v1835, %v1916
        %1918 = vmatmul.bf16.gmra.mxu0 %v1076
        %v1919 = vpop.f32.mrf.mxu0
        %v1920 = vadd.f32 %v1835, %v1919
        %v1921 = vpop.f32.mrf.mxu0
        %v1922 = vadd.f32 %v1835, %v1921
        %1923 = vmatmul.bf16.gmra.mxu0 %v1077
        %v1924 = vpop.f32.mrf.mxu0
        %v1925 = vadd.f32 %v1835, %v1924
        %v1926 = vpop.f32.mrf.mxu0
        %v1927 = vadd.f32 %v1835, %v1926
        %1928 = vmatmul.bf16.gmra.mxu0 %v1078
        %v1929 = vpop.f32.mrf.mxu0
        %v1930 = vadd.f32 %v1835, %v1929
        %v1931 = vpop.f32.mrf.mxu0
        %v1932 = vadd.f32 %v1835, %v1931
        %1933 = vmatmul.bf16.gmra.mxu0 %v1079
        %v1934 = vpop.f32.mrf.mxu0
        %v1935 = vadd.f32 %v1835, %v1934
        %v1936 = vpop.f32.mrf.mxu0
        %v1937 = vadd.f32 %v1835, %v1936
        %1938 = vmatmul.bf16.gmra.mxu0 %v1080
        %v1939 = vpop.f32.mrf.mxu0
        %v1940 = vadd.f32 %v1835, %v1939
        %v1941 = vpop.f32.mrf.mxu0
        %v1942 = vadd.f32 %v1835, %v1941
        %1943 = vmatmul.bf16.gmra.mxu0 %v1081
        %v1944 = vpop.f32.mrf.mxu0
        %v1945 = vadd.f32 %v1835, %v1944
        %v1946 = vpop.f32.mrf.mxu0
        %v1947 = vadd.f32 %v1835, %v1946
        %1948 = vmatmul.bf16.gmra.mxu0 %v1082
        %v1949 = vpop.f32.mrf.mxu0
        %v1950 = vadd.f32 %v1835, %v1949
        %v1951 = vpop.f32.mrf.mxu0
        %v1952 = vadd.f32 %v1835, %v1951
        %1953 = vmatmul.bf16.gmra.mxu0 %v1083
        %v1954 = vpop.f32.mrf.mxu0
        %v1955 = vadd.f32 %v1835, %v1954
        %v1956 = vpop.f32.mrf.mxu0
        %v1957 = vadd.f32 %v1835, %v1956
        %1958 = vmatmul.bf16.gmra.mxu0 %v1084
        %v1959 = vpop.f32.mrf.mxu0
        %v1960 = vadd.f32 %v1835, %v1959
        %v1961 = vpop.f32.mrf.mxu0
        %v1962 = vadd.f32 %v1835, %v1961
        %1963 = vmatmul.bf16.gmra.mxu0 %v1085
        %v1964 = vpop.f32.mrf.mxu0
        %v1965 = vadd.f32 %v1835, %v1964
        %v1966 = vpop.f32.mrf.mxu0
        %v1967 = vadd.f32 %v1835, %v1966
        %1968 = vmatmul.bf16.gmra.mxu0 %v1086
        %v1969 = vpop.f32.mrf.mxu0
        %v1970 = vadd.f32 %v1835, %v1969
        %v1971 = vpop.f32.mrf.mxu0
        %v1972 = vadd.f32 %v1835, %v1971
        %1973 = vdwg.mxu0
        %1974 = vset.pattern.permute.xlu0 2
        %1975 = vperm.xlu0 %1974, %v696
        %v1976 = vpop.permute.xlu0 %1975
        %1978 = vset.pattern.permute.xlu0 2
        %1979 = vperm.xlu0 %1978, %v698
        %v1980 = vpop.permute.xlu0 %1979
        %1982 = vset.pattern.permute.xlu0 2
        %1983 = vperm.xlu0 %1982, %v701
        %v1984 = vpop.permute.xlu0 %1983
        %1986 = vset.pattern.permute.xlu0 2
        %1987 = vperm.xlu0 %1986, %v703
        %v1988 = vpop.permute.xlu0 %1987
        %1990 = vset.pattern.permute.xlu0 2
        %1991 = vperm.xlu0 %1990, %v706
        %v1992 = vpop.permute.xlu0 %1991
        %1994 = vset.pattern.permute.xlu0 2
        %1995 = vperm.xlu0 %1994, %v708
        %v1996 = vpop.permute.xlu0 %1995
        %1998 = vset.pattern.permute.xlu0 2
        %1999 = vperm.xlu0 %1998, %v711
        %v2000 = vpop.permute.xlu0 %1999
        %2002 = vset.pattern.permute.xlu0 2
        %2003 = vperm.xlu0 %2002, %v713
        %v2004 = vpop.permute.xlu0 %2003
        %2006 = vset.pattern.permute.xlu0 2
        %2007 = vperm.xlu0 %2006, %v716
        %v2008 = vpop.permute.xlu0 %2007
        %2010 = vset.pattern.permute.xlu0 2
        %2011 = vperm.xlu0 %2010, %v718
        %v2012 = vpop.permute.xlu0 %2011
        %2014 = vset.pattern.permute.xlu0 2
        %2015 = vperm.xlu0 %2014, %v721
        %v2016 = vpop.permute.xlu0 %2015
        %2018 = vset.pattern.permute.xlu0 2
        %2019 = vperm.xlu0 %2018, %v723
        %v2020 = vpop.permute.xlu0 %2019
        %2022 = vset.pattern.permute.xlu0 2
        %2023 = vperm.xlu0 %2022, %v726
        %v2024 = vpop.permute.xlu0 %2023
        %2026 = vset.pattern.permute.xlu0 2
        %2027 = vperm.xlu0 %2026, %v728
        %v2028 = vpop.permute.xlu0 %2027
        %2030 = vset.pattern.permute.xlu0 2
        %2031 = vperm.xlu0 %2030, %v731
        %v2032 = vpop.permute.xlu0 %2031
        %2034 = vset.pattern.permute.xlu0 2
        %2035 = vperm.xlu0 %2034, %v733
        %v2036 = vpop.permute.xlu0 %2035
        %2038 = vset.pattern.permute.xlu0 2
        %2039 = vperm.xlu0 %2038, %v736
        %v2040 = vpop.permute.xlu0 %2039
        %2042 = vset.pattern.permute.xlu0 2
        %2043 = vperm.xlu0 %2042, %v738
        %v2044 = vpop.permute.xlu0 %2043
        %2046 = vset.pattern.permute.xlu0 2
        %2047 = vperm.xlu0 %2046, %v741
        %v2048 = vpop.permute.xlu0 %2047
        %2050 = vset.pattern.permute.xlu0 2
        %2051 = vperm.xlu0 %2050, %v743
        %v2052 = vpop.permute.xlu0 %2051
        %2054 = vset.pattern.permute.xlu0 2
        %2055 = vperm.xlu0 %2054, %v746
        %v2056 = vpop.permute.xlu0 %2055
        %2058 = vset.pattern.permute.xlu0 2
        %2059 = vperm.xlu0 %2058, %v748
        %v2060 = vpop.permute.xlu0 %2059
        %2062 = vset.pattern.permute.xlu0 2
        %2063 = vperm.xlu0 %2062, %v751
        %v2064 = vpop.permute.xlu0 %2063
        %2066 = vset.pattern.permute.xlu0 2
        %2067 = vperm.xlu0 %2066, %v753
        %v2068 = vpop.permute.xlu0 %2067
        %2070 = vset.pattern.permute.xlu0 2
        %2071 = vperm.xlu0 %2070, %v756
        %v2072 = vpop.permute.xlu0 %2071
        %2074 = vset.pattern.permute.xlu0 2
        %2075 = vperm.xlu0 %2074, %v758
        %v2076 = vpop.permute.xlu0 %2075
        %2078 = vset.pattern.permute.xlu0 2
        %2079 = vperm.xlu0 %2078, %v761
        %v2080 = vpop.permute.xlu0 %2079
        %2082 = vset.pattern.permute.xlu0 2
        %2083 = vperm.xlu0 %2082, %v763
        %v2084 = vpop.permute.xlu0 %2083
        %2086 = vset.pattern.permute.xlu0 2
        %2087 = vperm.xlu0 %2086, %v766
        %v2088 = vpop.permute.xlu0 %2087
        %2090 = vset.pattern.permute.xlu0 2
        %2091 = vperm.xlu0 %2090, %v768
        %v2092 = vpop.permute.xlu0 %2091
        %2094 = vset.pattern.permute.xlu0 2
        %2095 = vperm.xlu0 %2094, %v771
        %v2096 = vpop.permute.xlu0 %2095
        %2098 = vset.pattern.permute.xlu0 2
        %2099 = vperm.xlu0 %2098, %v773
        %v2100 = vpop.permute.xlu0 %2099
        %v2102 = vmul.f32 %v1976, %v1895
        %v2103 = vmul.f32 %v1980, %v1897
        %v2104 = vmul.f32 %v1984, %v1900
        %v2105 = vmul.f32 %v1988, %v1902
        %v2106 = vmul.f32 %v1992, %v1905
        %v2107 = vmul.f32 %v1996, %v1907
        %v2108 = vmul.f32 %v2000, %v1910
        %v2109 = vmul.f32 %v2004, %v1912
        %v2110 = vmul.f32 %v2008, %v1915
        %v2111 = vmul.f32 %v2012, %v1917
        %v2112 = vmul.f32 %v2016, %v1920
        %v2113 = vmul.f32 %v2020, %v1922
        %v2114 = vmul.f32 %v2024, %v1925
        %v2115 = vmul.f32 %v2028, %v1927
        %v2116 = vmul.f32 %v2032, %v1930
        %v2117 = vmul.f32 %v2036, %v1932
        %v2118 = vmul.f32 %v2040, %v1935
        %v2119 = vmul.f32 %v2044, %v1937
        %v2120 = vmul.f32 %v2048, %v1940
        %v2121 = vmul.f32 %v2052, %v1942
        %v2122 = vmul.f32 %v2056, %v1945
        %v2123 = vmul.f32 %v2060, %v1947
        %v2124 = vmul.f32 %v2064, %v1950
        %v2125 = vmul.f32 %v2068, %v1952
        %v2126 = vmul.f32 %v2072, %v1955
        %v2127 = vmul.f32 %v2076, %v1957
        %v2128 = vmul.f32 %v2080, %v1960
        %v2129 = vmul.f32 %v2084, %v1962
        %v2130 = vmul.f32 %v2088, %v1965
        %v2131 = vmul.f32 %v2092, %v1967
        %v2132 = vmul.f32 %v2096, %v1970
        %v2133 = vmul.f32 %v2100, %v1972
        %v2134 = vadd.f32 %v1785, %v2102
        %v2135 = vadd.f32 %v1786, %v2103
        %v2136 = vadd.f32 %v1787, %v2104
        %v2137 = vadd.f32 %v1788, %v2105
        %v2138 = vadd.f32 %v1789, %v2106
        %v2139 = vadd.f32 %v1790, %v2107
        %v2140 = vadd.f32 %v1791, %v2108
        %v2141 = vadd.f32 %v1792, %v2109
        %v2142 = vadd.f32 %v1793, %v2110
        %v2143 = vadd.f32 %v1794, %v2111
        %v2144 = vadd.f32 %v1795, %v2112
        %v2145 = vadd.f32 %v1796, %v2113
        %v2146 = vadd.f32 %v1797, %v2114
        %v2147 = vadd.f32 %v1798, %v2115
        %v2148 = vadd.f32 %v1799, %v2116
        %v2149 = vadd.f32 %v1800, %v2117
        %v2150 = vadd.f32 %v1801, %v2118
        %v2151 = vadd.f32 %v1802, %v2119
        %v2152 = vadd.f32 %v1803, %v2120
        %v2153 = vadd.f32 %v1804, %v2121
        %v2154 = vadd.f32 %v1805, %v2122
        %v2155 = vadd.f32 %v1806, %v2123
        %v2156 = vadd.f32 %v1807, %v2124
        %v2157 = vadd.f32 %v1808, %v2125
        %v2158 = vadd.f32 %v1809, %v2126
        %v2159 = vadd.f32 %v1810, %v2127
        %v2160 = vadd.f32 %v1811, %v2128
        %v2161 = vadd.f32 %v1812, %v2129
        %v2162 = vadd.f32 %v1813, %v2130
        %v2163 = vadd.f32 %v1814, %v2131
        %v2164 = vadd.f32 %v1815, %v2132
        %v2165 = vadd.f32 %v1816, %v2133
        %v2166 = vld [vmem:[%s6 + $0xc] sm:$0xf]
        %v2167 = vld [vmem:[%s6 + $0x1c] sm:$0xf]
        %v2168 = vld [vmem:[%s6 + $0x2c] sm:$0xf]
        %v2169 = vld [vmem:[%s6 + $0x3c] sm:$0xf]
        %v2170 = vld [vmem:[%s6 + $0x4c] sm:$0xf]
        %v2171 = vld [vmem:[%s6 + $0x5c] sm:$0xf]
        %v2172 = vld [vmem:[%s6 + $0x6c] sm:$0xf]
        %v2173 = vld [vmem:[%s6 + $0x7c] sm:$0xf]
        %v2174 = vld [vmem:[%s6 + $0x8c] sm:$0xf]
        %v2175 = vld [vmem:[%s6 + $0x9c] sm:$0xf]
        %v2176 = vld [vmem:[%s6 + $0xac] sm:$0xf]
        %v2177 = vld [vmem:[%s6 + $0xbc] sm:$0xf]
        %v2178 = vld [vmem:[%s6 + $0xcc] sm:$0xf]
        %v2179 = vld [vmem:[%s6 + $0xdc] sm:$0xf]
        %v2180 = vld [vmem:[%s6 + $0xec] sm:$0xf]
        %v2181 = vld [vmem:[%s6 + $0xfc] sm:$0xf]
        %v2182 = vld [vmem:[%s7 + $0x3] sm:$0x1]
        %v2184 = vperm.slane %v2182, 0
        %v2202 = vunpack.c.l.b16 %v2166
        %v2203 = vunpack.c.l.b16 %v2167
        %v2204 = vunpack.c.l.b16 %v2168
        %v2205 = vunpack.c.l.b16 %v2169
        %v2206 = vunpack.c.l.b16 %v2170
        %v2207 = vunpack.c.l.b16 %v2171
        %v2208 = vunpack.c.l.b16 %v2172
        %v2209 = vunpack.c.l.b16 %v2173
        %v2210 = vunpack.c.l.b16 %v2174
        %v2211 = vunpack.c.l.b16 %v2175
        %v2212 = vunpack.c.l.b16 %v2176
        %v2213 = vunpack.c.l.b16 %v2177
        %v2214 = vunpack.c.l.b16 %v2178
        %v2215 = vunpack.c.l.b16 %v2179
        %v2216 = vunpack.c.l.b16 %v2180
        %v2217 = vunpack.c.l.b16 %v2181
        %v2218 = vpack.c.b16 %v2203, %v2202
        %v2219 = vpack.c.b16 %v2205, %v2204
        %v2220 = vpack.c.b16 %v2207, %v2206
        %v2221 = vpack.c.b16 %v2209, %v2208
        %v2222 = vpack.c.b16 %v2211, %v2210
        %v2223 = vpack.c.b16 %v2213, %v2212
        %v2224 = vpack.c.b16 %v2215, %v2214
        %v2225 = vpack.c.b16 %v2217, %v2216
        %2234 = vmatpush.bf16.msra.mxu0 %v2225
        %2235 = vmatpush.bf16.msra.mxu0 %v2224
        %2236 = vmatpush.bf16.msra.mxu0 %v2223
        %2237 = vmatpush.bf16.msra.mxu0 %v2222
        %2238 = vmatpush.bf16.msra.mxu0 %v2221
        %2239 = vmatpush.bf16.msra.mxu0 %v2220
        %2240 = vmatpush.bf16.msra.mxu0 %v2219
        %2241 = vmatpush.bf16.msra.mxu0 %v2218
        %2242 = vmatmul.bf16.gmra.mxu0 %v1071
        %v2243 = vpop.f32.mrf.mxu0
        %v2244 = vadd.f32 %v2184, %v2243
        %v2245 = vpop.f32.mrf.mxu0
        %v2246 = vadd.f32 %v2184, %v2245
        %2247 = vmatmul.bf16.gmra.mxu0 %v1072
        %v2248 = vpop.f32.mrf.mxu0
        %v2249 = vadd.f32 %v2184, %v2248
        %v2250 = vpop.f32.mrf.mxu0
        %v2251 = vadd.f32 %v2184, %v2250
        %2252 = vmatmul.bf16.gmra.mxu0 %v1073
        %v2253 = vpop.f32.mrf.mxu0
        %v2254 = vadd.f32 %v2184, %v2253
        %v2255 = vpop.f32.mrf.mxu0
        %v2256 = vadd.f32 %v2184, %v2255
        %2257 = vmatmul.bf16.gmra.mxu0 %v1074
        %v2258 = vpop.f32.mrf.mxu0
        %v2259 = vadd.f32 %v2184, %v2258
        %v2260 = vpop.f32.mrf.mxu0
        %v2261 = vadd.f32 %v2184, %v2260
        %2262 = vmatmul.bf16.gmra.mxu0 %v1075
        %v2263 = vpop.f32.mrf.mxu0
        %v2264 = vadd.f32 %v2184, %v2263
        %v2265 = vpop.f32.mrf.mxu0
        %v2266 = vadd.f32 %v2184, %v2265
        %2267 = vmatmul.bf16.gmra.mxu0 %v1076
        %v2268 = vpop.f32.mrf.mxu0
        %v2269 = vadd.f32 %v2184, %v2268
        %v2270 = vpop.f32.mrf.mxu0
        %v2271 = vadd.f32 %v2184, %v2270
        %2272 = vmatmul.bf16.gmra.mxu0 %v1077
        %v2273 = vpop.f32.mrf.mxu0
        %v2274 = vadd.f32 %v2184, %v2273
        %v2275 = vpop.f32.mrf.mxu0
        %v2276 = vadd.f32 %v2184, %v2275
        %2277 = vmatmul.bf16.gmra.mxu0 %v1078
        %v2278 = vpop.f32.mrf.mxu0
        %v2279 = vadd.f32 %v2184, %v2278
        %v2280 = vpop.f32.mrf.mxu0
        %v2281 = vadd.f32 %v2184, %v2280
        %2282 = vmatmul.bf16.gmra.mxu0 %v1079
        %v2283 = vpop.f32.mrf.mxu0
        %v2284 = vadd.f32 %v2184, %v2283
        %v2285 = vpop.f32.mrf.mxu0
        %v2286 = vadd.f32 %v2184, %v2285
        %2287 = vmatmul.bf16.gmra.mxu0 %v1080
        %v2288 = vpop.f32.mrf.mxu0
        %v2289 = vadd.f32 %v2184, %v2288
        %v2290 = vpop.f32.mrf.mxu0
        %v2291 = vadd.f32 %v2184, %v2290
        %2292 = vmatmul.bf16.gmra.mxu0 %v1081
        %v2293 = vpop.f32.mrf.mxu0
        %v2294 = vadd.f32 %v2184, %v2293
        %v2295 = vpop.f32.mrf.mxu0
        %v2296 = vadd.f32 %v2184, %v2295
        %2297 = vmatmul.bf16.gmra.mxu0 %v1082
        %v2298 = vpop.f32.mrf.mxu0
        %v2299 = vadd.f32 %v2184, %v2298
        %v2300 = vpop.f32.mrf.mxu0
        %v2301 = vadd.f32 %v2184, %v2300
        %2302 = vmatmul.bf16.gmra.mxu0 %v1083
        %v2303 = vpop.f32.mrf.mxu0
        %v2304 = vadd.f32 %v2184, %v2303
        %v2305 = vpop.f32.mrf.mxu0
        %v2306 = vadd.f32 %v2184, %v2305
        %2307 = vmatmul.bf16.gmra.mxu0 %v1084
        %v2308 = vpop.f32.mrf.mxu0
        %v2309 = vadd.f32 %v2184, %v2308
        %v2310 = vpop.f32.mrf.mxu0
        %v2311 = vadd.f32 %v2184, %v2310
        %2312 = vmatmul.bf16.gmra.mxu0 %v1085
        %v2313 = vpop.f32.mrf.mxu0
        %v2314 = vadd.f32 %v2184, %v2313
        %v2315 = vpop.f32.mrf.mxu0
        %v2316 = vadd.f32 %v2184, %v2315
        %2317 = vmatmul.bf16.gmra.mxu0 %v1086
        %v2318 = vpop.f32.mrf.mxu0
        %v2319 = vadd.f32 %v2184, %v2318
        %v2320 = vpop.f32.mrf.mxu0
        %v2321 = vadd.f32 %v2184, %v2320
        %2322 = vdwg.mxu0
        %2323 = vset.pattern.permute.xlu0 3
        %2324 = vperm.xlu0 %2323, %v696
        %v2325 = vpop.permute.xlu0 %2324
        %2327 = vset.pattern.permute.xlu0 3
        %2328 = vperm.xlu0 %2327, %v698
        %v2329 = vpop.permute.xlu0 %2328
        %2331 = vset.pattern.permute.xlu0 3
        %2332 = vperm.xlu0 %2331, %v701
        %v2333 = vpop.permute.xlu0 %2332
        %2335 = vset.pattern.permute.xlu0 3
        %2336 = vperm.xlu0 %2335, %v703
        %v2337 = vpop.permute.xlu0 %2336
        %2339 = vset.pattern.permute.xlu0 3
        %2340 = vperm.xlu0 %2339, %v706
        %v2341 = vpop.permute.xlu0 %2340
        %2343 = vset.pattern.permute.xlu0 3
        %2344 = vperm.xlu0 %2343, %v708
        %v2345 = vpop.permute.xlu0 %2344
        %2347 = vset.pattern.permute.xlu0 3
        %2348 = vperm.xlu0 %2347, %v711
        %v2349 = vpop.permute.xlu0 %2348
        %2351 = vset.pattern.permute.xlu0 3
        %2352 = vperm.xlu0 %2351, %v713
        %v2353 = vpop.permute.xlu0 %2352
        %2355 = vset.pattern.permute.xlu0 3
        %2356 = vperm.xlu0 %2355, %v716
        %v2357 = vpop.permute.xlu0 %2356
        %2359 = vset.pattern.permute.xlu0 3
        %2360 = vperm.xlu0 %2359, %v718
        %v2361 = vpop.permute.xlu0 %2360
        %2363 = vset.pattern.permute.xlu0 3
        %2364 = vperm.xlu0 %2363, %v721
        %v2365 = vpop.permute.xlu0 %2364
        %2367 = vset.pattern.permute.xlu0 3
        %2368 = vperm.xlu0 %2367, %v723
        %v2369 = vpop.permute.xlu0 %2368
        %2371 = vset.pattern.permute.xlu0 3
        %2372 = vperm.xlu0 %2371, %v726
        %v2373 = vpop.permute.xlu0 %2372
        %2375 = vset.pattern.permute.xlu0 3
        %2376 = vperm.xlu0 %2375, %v728
        %v2377 = vpop.permute.xlu0 %2376
        %2379 = vset.pattern.permute.xlu0 3
        %2380 = vperm.xlu0 %2379, %v731
        %v2381 = vpop.permute.xlu0 %2380
        %2383 = vset.pattern.permute.xlu0 3
        %2384 = vperm.xlu0 %2383, %v733
        %v2385 = vpop.permute.xlu0 %2384
        %2387 = vset.pattern.permute.xlu0 3
        %2388 = vperm.xlu0 %2387, %v736
        %v2389 = vpop.permute.xlu0 %2388
        %2391 = vset.pattern.permute.xlu0 3
        %2392 = vperm.xlu0 %2391, %v738
        %v2393 = vpop.permute.xlu0 %2392
        %2395 = vset.pattern.permute.xlu0 3
        %2396 = vperm.xlu0 %2395, %v741
        %v2397 = vpop.permute.xlu0 %2396
        %2399 = vset.pattern.permute.xlu0 3
        %2400 = vperm.xlu0 %2399, %v743
        %v2401 = vpop.permute.xlu0 %2400
        %2403 = vset.pattern.permute.xlu0 3
        %2404 = vperm.xlu0 %2403, %v746
        %v2405 = vpop.permute.xlu0 %2404
        %2407 = vset.pattern.permute.xlu0 3
        %2408 = vperm.xlu0 %2407, %v748
        %v2409 = vpop.permute.xlu0 %2408
        %2411 = vset.pattern.permute.xlu0 3
        %2412 = vperm.xlu0 %2411, %v751
        %v2413 = vpop.permute.xlu0 %2412
        %2415 = vset.pattern.permute.xlu0 3
        %2416 = vperm.xlu0 %2415, %v753
        %v2417 = vpop.permute.xlu0 %2416
        %2419 = vset.pattern.permute.xlu0 3
        %2420 = vperm.xlu0 %2419, %v756
        %v2421 = vpop.permute.xlu0 %2420
        %2423 = vset.pattern.permute.xlu0 3
        %2424 = vperm.xlu0 %2423, %v758
        %v2425 = vpop.permute.xlu0 %2424
        %2427 = vset.pattern.permute.xlu0 3
        %2428 = vperm.xlu0 %2427, %v761
        %v2429 = vpop.permute.xlu0 %2428
        %2431 = vset.pattern.permute.xlu0 3
        %2432 = vperm.xlu0 %2431, %v763
        %v2433 = vpop.permute.xlu0 %2432
        %2435 = vset.pattern.permute.xlu0 3
        %2436 = vperm.xlu0 %2435, %v766
        %v2437 = vpop.permute.xlu0 %2436
        %2439 = vset.pattern.permute.xlu0 3
        %2440 = vperm.xlu0 %2439, %v768
        %v2441 = vpop.permute.xlu0 %2440
        %2443 = vset.pattern.permute.xlu0 3
        %2444 = vperm.xlu0 %2443, %v771
        %v2445 = vpop.permute.xlu0 %2444
        %2447 = vset.pattern.permute.xlu0 3
        %2448 = vperm.xlu0 %2447, %v773
        %v2449 = vpop.permute.xlu0 %2448
        %v2451 = vmul.f32 %v2325, %v2244
        %v2452 = vmul.f32 %v2329, %v2246
        %v2453 = vmul.f32 %v2333, %v2249
        %v2454 = vmul.f32 %v2337, %v2251
        %v2455 = vmul.f32 %v2341, %v2254
        %v2456 = vmul.f32 %v2345, %v2256
        %v2457 = vmul.f32 %v2349, %v2259
        %v2458 = vmul.f32 %v2353, %v2261
        %v2459 = vmul.f32 %v2357, %v2264
        %v2460 = vmul.f32 %v2361, %v2266
        %v2461 = vmul.f32 %v2365, %v2269
        %v2462 = vmul.f32 %v2369, %v2271
        %v2463 = vmul.f32 %v2373, %v2274
        %v2464 = vmul.f32 %v2377, %v2276
        %v2465 = vmul.f32 %v2381, %v2279
        %v2466 = vmul.f32 %v2385, %v2281
        %v2467 = vmul.f32 %v2389, %v2284
        %v2468 = vmul.f32 %v2393, %v2286
        %v2469 = vmul.f32 %v2397, %v2289
        %v2470 = vmul.f32 %v2401, %v2291
        %v2471 = vmul.f32 %v2405, %v2294
        %v2472 = vmul.f32 %v2409, %v2296
        %v2473 = vmul.f32 %v2413, %v2299
        %v2474 = vmul.f32 %v2417, %v2301
        %v2475 = vmul.f32 %v2421, %v2304
        %v2476 = vmul.f32 %v2425, %v2306
        %v2477 = vmul.f32 %v2429, %v2309
        %v2478 = vmul.f32 %v2433, %v2311
        %v2479 = vmul.f32 %v2437, %v2314
        %v2480 = vmul.f32 %v2441, %v2316
        %v2481 = vmul.f32 %v2445, %v2319
        %v2482 = vmul.f32 %v2449, %v2321
        %v2483 = vadd.f32 %v2134, %v2451
        %v2484 = vadd.f32 %v2135, %v2452
        %v2485 = vadd.f32 %v2136, %v2453
        %v2486 = vadd.f32 %v2137, %v2454
        %v2487 = vadd.f32 %v2138, %v2455
        %v2488 = vadd.f32 %v2139, %v2456
        %v2489 = vadd.f32 %v2140, %v2457
        %v2490 = vadd.f32 %v2141, %v2458
        %v2491 = vadd.f32 %v2142, %v2459
        %v2492 = vadd.f32 %v2143, %v2460
        %v2493 = vadd.f32 %v2144, %v2461
        %v2494 = vadd.f32 %v2145, %v2462
        %v2495 = vadd.f32 %v2146, %v2463
        %v2496 = vadd.f32 %v2147, %v2464
        %v2497 = vadd.f32 %v2148, %v2465
        %v2498 = vadd.f32 %v2149, %v2466
        %v2499 = vadd.f32 %v2150, %v2467
        %v2500 = vadd.f32 %v2151, %v2468
        %v2501 = vadd.f32 %v2152, %v2469
        %v2502 = vadd.f32 %v2153, %v2470
        %v2503 = vadd.f32 %v2154, %v2471
        %v2504 = vadd.f32 %v2155, %v2472
        %v2505 = vadd.f32 %v2156, %v2473
        %v2506 = vadd.f32 %v2157, %v2474
        %v2507 = vadd.f32 %v2158, %v2475
        %v2508 = vadd.f32 %v2159, %v2476
        %v2509 = vadd.f32 %v2160, %v2477
        %v2510 = vadd.f32 %v2161, %v2478
        %v2511 = vadd.f32 %v2162, %v2479
        %v2512 = vadd.f32 %v2163, %v2480
        %v2513 = vadd.f32 %v2164, %v2481
        %v2514 = vadd.f32 %v2165, %v2482
        %vm2515 = vcmp.eq.s32.totalorder %v388, 32
        %v2516 = vsel %vm2515, 1, 0
        %vm2517 = vcmp.eq.s32.totalorder %v2516, 1
        %v2518 = vsel %vm2517, 1.0, %v2483
        %v2519 = vsel %vm2517, 1.0, %v2484
        %v2520 = vsel %vm2517, 1.0, %v2485
        %v2521 = vsel %vm2517, 1.0, %v2486
        %v2522 = vsel %vm2517, 1.0, %v2487
        %v2523 = vsel %vm2517, 1.0, %v2488
        %v2524 = vsel %vm2517, 1.0, %v2489
        %v2525 = vsel %vm2517, 1.0, %v2490
        %v2526 = vsel %vm2517, 1.0, %v2491
        %v2527 = vsel %vm2517, 1.0, %v2492
        %v2528 = vsel %vm2517, 1.0, %v2493
        %v2529 = vsel %vm2517, 1.0, %v2494
        %v2530 = vsel %vm2517, 1.0, %v2495
        %v2531 = vsel %vm2517, 1.0, %v2496
        %v2532 = vsel %vm2517, 1.0, %v2497
        %v2533 = vsel %vm2517, 1.0, %v2498
        %v2534 = vsel %vm2517, 1.0, %v2499
        %v2535 = vsel %vm2517, 1.0, %v2500
        %v2536 = vsel %vm2517, 1.0, %v2501
        %v2537 = vsel %vm2517, 1.0, %v2502
        %v2538 = vsel %vm2517, 1.0, %v2503
        %v2539 = vsel %vm2517, 1.0, %v2504
        %v2540 = vsel %vm2517, 1.0, %v2505
        %v2541 = vsel %vm2517, 1.0, %v2506
        %v2542 = vsel %vm2517, 1.0, %v2507
        %v2543 = vsel %vm2517, 1.0, %v2508
        %v2544 = vsel %vm2517, 1.0, %v2509
        %v2545 = vsel %vm2517, 1.0, %v2510
        %v2546 = vsel %vm2517, 1.0, %v2511
        %v2547 = vsel %vm2517, 1.0, %v2512
        %v2548 = vsel %vm2517, 1.0, %v2513
        %v2549 = vsel %vm2517, 1.0, %v2514
        %v2550 = vlaneseq
        %v2551 = vshrl.u32 %v2550, 7
        %v2552 = vadd.s32 %v2551, 8
        %v2553 = vld [vmem:[%s377] sm:$0x3]
        %v2554 = vperm.slane %v2553, 0
        %v2555 = vperm.slane %v2553, 1
        %vm2556 = vcmp.eq.s32.totalorder %v2551, %v2554
        %vm2557 = vcmp.eq.s32.totalorder %v2551, %v2555
        %vm2558 = vcmp.eq.s32.totalorder %v2552, %v2554
        %vm2559 = vcmp.eq.s32.totalorder %v2552, %v2555
        %v2560 = vsel %vm2556, 1, 0
        %v2561 = vsel %vm2557, 1, 0
        %v2562 = vsel %vm2558, 1, 0
        %v2563 = vsel %vm2559, 1, 0
        %v2564 = vcvt.s32.f32 %v2560
        %v2565 = vcvt.s32.f32 %v2561
        %v2566 = vcvt.s32.f32 %v2562
        %v2567 = vcvt.s32.f32 %v2563
        %v2568 = vpack.c.bf16 %v2566, %v2564
        %v2569 = vpack.c.bf16 %v2567, %v2565
        %v2570 = vld [vmem:[%s356] sm:$0xff]
        %v2571 = vld [vmem:[%s356 + $0x8] sm:$0xff]
        %v2572 = vpack.c.bf16 %v2519, %v2518
        %v2573 = vpack.c.bf16 %v2521, %v2520
        %v2574 = vpack.c.bf16 %v2523, %v2522
        %v2575 = vpack.c.bf16 %v2525, %v2524
        %v2576 = vpack.c.bf16 %v2527, %v2526
        %v2577 = vpack.c.bf16 %v2529, %v2528
        %v2578 = vpack.c.bf16 %v2531, %v2530
        %v2579 = vpack.c.bf16 %v2533, %v2532
        %v2580 = vpack.c.bf16 %v2535, %v2534
        %v2581 = vpack.c.bf16 %v2537, %v2536
        %v2582 = vpack.c.bf16 %v2539, %v2538
        %v2583 = vpack.c.bf16 %v2541, %v2540
        %v2584 = vpack.c.bf16 %v2543, %v2542
        %v2585 = vpack.c.bf16 %v2545, %v2544
        %v2586 = vpack.c.bf16 %v2547, %v2546
        %v2587 = vpack.c.bf16 %v2549, %v2548
        %2588 = vmatpush.bf16.msra.mxu0 %v2579
        %2589 = vmatpush.bf16.msra.mxu0 %v2578
        %2590 = vmatpush.bf16.msra.mxu0 %v2577
        %2591 = vmatpush.bf16.msra.mxu0 %v2576
        %2592 = vmatpush.bf16.msra.mxu0 %v2575
        %2593 = vmatpush.bf16.msra.mxu0 %v2574
        %2594 = vmatpush.bf16.msra.mxu0 %v2573
        %2595 = vmatpush.bf16.msra.mxu0 %v2572
        %2596 = vmatmul.bf16.gmra.mxu0 %v2568
        %v2597 = vpop.f32.mrf.mxu0
        %v2598 = vadd.f32 0.0, %v2597
        %v2599 = vpop.f32.mrf.mxu0
        %v2600 = vadd.f32 0.0, %v2599
        %2601 = vdwg.mxu0
        %2602 = vmatpush.bf16.msra.mxu0 %v2587
        %2603 = vmatpush.bf16.msra.mxu0 %v2586
        %2604 = vmatpush.bf16.msra.mxu0 %v2585
        %2605 = vmatpush.bf16.msra.mxu0 %v2584
        %2606 = vmatpush.bf16.msra.mxu0 %v2583
        %2607 = vmatpush.bf16.msra.mxu0 %v2582
        %2608 = vmatpush.bf16.msra.mxu0 %v2581
        %2609 = vmatpush.bf16.msra.mxu0 %v2580
        %2610 = vmatmul.bf16.gmra.mxu0 %v2569
        %v2611 = vpop.f32.mrf.mxu0
        %v2612 = vadd.f32 %v2598, %v2611
        %v2613 = vpop.f32.mrf.mxu0
        %v2614 = vadd.f32 %v2600, %v2613
        %2615 = vdwg.mxu0
        %v2616 = vadd.f32 %v2570, %v2612
        %v2617 = vadd.f32 %v2571, %v2614
        %2618 = vst [vmem:[%s356] sm:$0xff] %v2616
        %2619 = vst [vmem:[%s356 + $0x8] sm:$0xff] %v2617
        %s2620 = sand.u32 %s231, 1
        %s2621 = scalar_lea.sflag [#allocation3], %s2620
        %s2622 = sand.u32 %s231, 1
        %s2623 = smul.addr %s2622, 16
        %s2624 = scalar_lea.vmem [#allocation2], %s2623
        // Predicated region
        $region57: #{tpu_custom_call.1} parent=51 // pred_check
          %p2625 = pneg %p241
        $region58: #{tpu_custom_call.1} parent=51 // pred_check_branch
          %2627 = sbr.rel (%p2625) target = $region60
        $region59: #{tpu_custom_call.1} parent=51 // pred_region
          %2629 = vsyncadd %s2621, 0
          %s2630 = smul.addr %s26, 2
          %s2631 = smul.addr %s2630, 8
          %s2632 = scalar_lea.hbm %s8, %s2631
          %s2633 = sshll.u32 %s2624, 4
          %s2634 = int_to_ptr.vmem [resolvable:$true] %s2633
          %s2635 = sshll.u32 %s2632, 4
          %s2636 = int_to_ptr.hbm [resolvable:$true] %s2635
          %2641 = dma.vmem_to_hbm [thread:$0]  %s2634, 256, %s2636, %s2621, 128, 128, 8
        $region60: #{tpu_custom_call.1} parent=51 // pred_fallthru
          _
      $region52: #{tpu_custom_call.1} parent=5 // pred_fallthru
        _
      %p2642 = scmp.le.s32.totalorder 2, %s17
      // Predicated region
      $region61: #{tpu_custom_call.1} parent=5 // pred_check
        %p2643 = pneg %p2642
      $region62: #{tpu_custom_call.1} parent=5 // pred_check_branch
        %2645 = sbr.rel (%p2643) target = $region64
      $region63: #{tpu_custom_call.1} parent=5 // pred_region
        %s2646 = ssub.s32 %s17, 2
        // Predicated region
        $region65: #{tpu_custom_call.1} parent=63 // pred_check
          %p2647 = pneg %p247
        $region66: #{tpu_custom_call.1} parent=63 // pred_check_branch
          %2649 = sbr.rel (%p2647) target = $region68
        $region67: #{tpu_custom_call.1} parent=63 // pred_region
          %s2650 = sand.u32 %s232, 1
          %s2651 = scalar_lea.sflag [#allocation3], %s2650
          %s2652 = sand.u32 %s232, 1
          %s2653 = smul.addr %s2652, 16
          %s2654 = scalar_lea.vmem [#allocation2], %s2653
          %2656 = dma.done %s2651, 256
        $region68: #{tpu_custom_call.1} parent=63 // pred_fallthru
          _
      $region64: #{tpu_custom_call.1} parent=5 // pred_fallthru
        _
    $region6: #{tpu_custom_call.1} parent=1 // loop_footer
      %s21 = sadd.s32 1, %s17
    $region7: #{tpu_custom_call.1} parent=1 // loop_footer_branch
      %16 = sbr.rel target = $region3
    $region8: #{tpu_custom_call.1} parent=1 // loop_exit
      _
    %2657 = vsyncpa [#allocation3], 1
    %s2658 = scalar_lea.sflag [#allocation3], 1
    %2659 = vsyncpa %s2658, 1

</llo_original>
